<compile_context>
chip_gen: v7x
topology: tpu7x:2x2x1
jax: 0.10.0
libtpu: 0.0.40
codegen_flags: <defaults>
</compile_context>

<pallas_src>
import jax
import jax.numpy as jnp
from jax.experimental import pallas as pl
from jax.experimental.pallas import tpu as pltpu

BN_EPS = 1e-5
LANE = 128


def _relu6(x):
    return jnp.clip(x, 0.0, 6.0)


def _round_up(n, m):
    return ((n + m - 1) // m) * m


def _make_generator_kernel(n_mid, batch):
    """Fused MLP kernel.  Ref order:
         x, w1, b1, [w_mid_i, gamma_beta_i]*n_mid, w_out, b_out, out
       All refs are full (small) arrays resident in VMEM."""
    inv_b = 1.0 / float(batch)

    def kernel(*refs):
        x_ref = refs[0]
        w1_ref, b1_ref = refs[1], refs[2]
        mid_refs = refs[3:3 + 2 * n_mid]
        wo_ref, bo_ref = refs[3 + 2 * n_mid], refs[4 + 2 * n_mid]
        out_ref = refs[5 + 2 * n_mid]

        # fc1 (bf16 MXU matmul, f32 accumulation) + bias + relu6
        h = jnp.dot(x_ref[...], w1_ref[...], preferred_element_type=jnp.float32)
        h = _relu6(h + b1_ref[...])

        # middle blocks: fc (bias dropped: BN mean-subtraction cancels it)
        #                -> BatchNorm (training-mode batch stats) -> relu6
        for i in range(n_mid):
            w_ref = mid_refs[2 * i + 0]
            gb_ref = mid_refs[2 * i + 1]          # row 0: gamma, row 1: beta

            h = jnp.dot(h.astype(jnp.bfloat16), w_ref[...],
                        preferred_element_type=jnp.float32)

            # One-pass batch stats (biased variance), affine folded into a
            # single scale/shift -> one fused mul-add over h.
            s1 = jnp.sum(h, axis=0, keepdims=True)
            s2 = jnp.sum(h * h, axis=0, keepdims=True)
            mean = s1 * inv_b
            var = s2 * inv_b - mean * mean
            scale = gb_ref[0:1, :] * jax.lax.rsqrt(var + BN_EPS)
            shift = gb_ref[1:2, :] - mean * scale
            h = _relu6(h * scale + shift)

        # out_fc + tanh (f32 output, lane-dense padded width)
        o = jnp.dot(h.astype(jnp.bfloat16), wo_ref[...],
                    preferred_element_type=jnp.float32)
        out_ref[...] = jnp.tanh(o + bo_ref[...])

    return kernel


def generator_forward(x, params):
    """params: dict with 'fc1' (w,b), 'mids' list of (w,b,gamma,beta), 'out' (w,b)."""
    w1, b1 = params["fc1"]
    mids = params["mids"]
    wo, bo = params["out"]
    n_mid = len(mids)

    batch, in_size = x.shape
    out_size = wo.shape[1]

    in_p = _round_up(in_size, LANE)
    out_p = _round_up(out_size, LANE)
    hid_sizes = [w1.shape[1]] + [w.shape[1] for (w, _, _, _) in mids]
    hid_p = [_round_up(h, LANE) for h in hid_sizes]

    def pad2(a, rows, cols):
        return jnp.pad(a, ((0, rows - a.shape[0]), (0, cols - a.shape[1])))

    # Zero-pad every feature dim to a multiple of 128; matmul operands in bf16.
    # Padded columns produce exactly-zero activations end-to-end.
    x_p = pad2(x, batch, in_p).astype(jnp.bfloat16)
    w1_p = pad2(w1, in_p, hid_p[0]).astype(jnp.bfloat16)
    b1_p = pad2(b1, 1, hid_p[0]).astype(jnp.float32)

    flat_args = [x_p, w1_p, b1_p]
    for i, (w, _b, g, be) in enumerate(mids):
        k_p, n_p = hid_p[i], hid_p[i + 1]
        flat_args.append(pad2(w, k_p, n_p).astype(jnp.bfloat16))
        # mid Linear bias dropped: exactly cancelled by BatchNorm's mean.
        gb = jnp.concatenate([pad2(g, 1, n_p), pad2(be, 1, n_p)], axis=0)
        flat_args.append(gb.astype(jnp.float32))
    flat_args.append(pad2(wo, hid_p[-1], out_p).astype(jnp.bfloat16))
    flat_args.append(pad2(bo, 1, out_p).astype(jnp.float32))

    # Scheduling hint for XLA and an explicit VMEM budget (shapes here are far
    # below both the v6e 128 MiB and v7x 64 MiB physical VMEM).
    matmul_flops = 2 * batch * (in_p * hid_p[0]
                                + sum(hid_p[i] * hid_p[i + 1] for i in range(n_mid))
                                + hid_p[-1] * out_p)
    transcendentals = batch * out_p + sum(hid_p[1:])  # tanh + BN rsqrt
    bytes_accessed = (sum(int(a.size) * a.dtype.itemsize for a in flat_args)
                      + batch * out_p * 4)
    cost = pl.CostEstimate(flops=int(matmul_flops),
                           transcendentals=int(transcendentals),
                           bytes_accessed=int(bytes_accessed))

    act_bytes = 4 * batch * max([in_p, out_p] + hid_p)
    vmem_limit = int(min(max(2 * (bytes_accessed + 6 * act_bytes), 8 << 20), 48 << 20))

    vmem_spec = pl.BlockSpec(memory_space=pltpu.VMEM)
    out_padded = pl.pallas_call(
        _make_generator_kernel(n_mid, batch),
        out_shape=jax.ShapeDtypeStruct((batch, out_p), jnp.float32),
        in_specs=[vmem_spec] * len(flat_args),
        out_specs=vmem_spec,
        cost_estimate=cost,
        compiler_params=pltpu.CompilerParams(vmem_limit_bytes=vmem_limit),
    )(*flat_args)

    return out_padded[:, :out_size]


def init_params(key, input_size, hidden_sizes, output_size):
    if isinstance(hidden_sizes, int):
        hidden_sizes = [hidden_sizes]
    hidden_sizes = list(hidden_sizes)

    def linear(key, fan_in, fan_out):
        kw, kb = jax.random.split(key)
        bound = 1.0 / jnp.sqrt(fan_in)
        w = jax.random.uniform(kw, (fan_in, fan_out), jnp.float32, -bound, bound)
        b = jax.random.uniform(kb, (1, fan_out), jnp.float32, -bound, bound)
        return w, b

    keys = jax.random.split(key, len(hidden_sizes) + 1)
    params = {"fc1": linear(keys[0], input_size, hidden_sizes[0]), "mids": []}
    for i in range(len(hidden_sizes) - 1):
        w, b = linear(keys[1 + i], hidden_sizes[i], hidden_sizes[i + 1])
        gamma = jnp.ones((1, hidden_sizes[i + 1]), jnp.float32)   # BatchNorm1d defaults
        beta = jnp.zeros((1, hidden_sizes[i + 1]), jnp.float32)
        params["mids"].append((w, b, gamma, beta))
    params["out"] = linear(keys[-1], hidden_sizes[-1], output_size)
    return params


def generator_reference(x, params):
    """Pure-JAX f32 reference with PyTorch semantics (incl. mid biases)."""
    w1, b1 = params["fc1"]
    h = _relu6(x @ w1 + b1)
    for (w, b, g, be) in params["mids"]:
        h = h @ w + b
        mean = jnp.mean(h, axis=0, keepdims=True)
        var = jnp.mean((h - mean) ** 2, axis=0, keepdims=True)
        h = _relu6((h - mean) / jnp.sqrt(var + BN_EPS) * g + be)
    wo, bo = params["out"]
    return jnp.tanh(h @ wo + bo)


if __name__ == "__main__":
    # MNIST-like generator: latent 100 -> [128, 256] -> 784; batch fills MXU rows.
    batch = 128
    input_size = 100
    hidden_sizes = [128, 256]
    output_size = 784

    key = jax.random.PRNGKey(0)
    kx, kp = jax.random.split(key)
    x = jax.random.normal(kx, (batch, input_size), jnp.float32)
    params = init_params(kp, input_size, hidden_sizes, output_size)

    out = jax.block_until_ready(generator_forward(x, params))
    ref = generator_reference(x, params)

    assert out.shape == (batch, output_size)
    assert bool(jnp.all(jnp.isfinite(out)))
    max_err = float(jnp.max(jnp.abs(out - ref)))
    assert max_err < 5e-2, f"max abs err {max_err}"  # bf16-matmul tolerance
    print("KERNEL_OK")
</pallas_src>

<mosaic_0001>
module attributes {stable_mosaic.version = 11 : i64} {
  func.func @kernel(%arg0: memref<128x128xbf16, #tpu.memory_space<vmem>>, %arg1: memref<128x128xbf16, #tpu.memory_space<vmem>>, %arg2: memref<1x128xf32, #tpu.memory_space<vmem>>, %arg3: memref<128x256xbf16, #tpu.memory_space<vmem>>, %arg4: memref<2x256xf32, #tpu.memory_space<vmem>>, %arg5: memref<256x896xbf16, #tpu.memory_space<vmem>>, %arg6: memref<1x896xf32, #tpu.memory_space<vmem>>, %arg7: memref<128x896xf32, #tpu.memory_space<vmem>>) attributes {dimension_semantics = [], scalar_prefetch = 0 : i64, scratch_operands = 0 : i64, tpu.core_type = #tpu.core_type<tc>} {
    %c0 = arith.constant 0 : index
    %c0_0 = arith.constant 0 : index
    %0 = vector.load %arg0[%c0, %c0_0] : memref<128x128xbf16, #tpu.memory_space<vmem>>, vector<128x128xbf16>
    %c0_1 = arith.constant 0 : index
    %c0_2 = arith.constant 0 : index
    %1 = vector.load %arg1[%c0_1, %c0_2] : memref<128x128xbf16, #tpu.memory_space<vmem>>, vector<128x128xbf16>
    %cst = arith.constant dense<0.000000e+00> : vector<128x128xf32>
    %2 = tpu.matmul %0, %1, %cst {dimension_numbers = #tpu.dot_dimension_numbers<[1], [0], [0], [1], [0, 0, 1, 1], [], []>} : vector<128x128xbf16>, vector<128x128xbf16>, vector<128x128xf32> -> vector<128x128xf32>
    %c0_3 = arith.constant 0 : index
    %c0_4 = arith.constant 0 : index
    %3 = vector.load %arg2[%c0_3, %c0_4] : memref<1x128xf32, #tpu.memory_space<vmem>>, vector<1x128xf32>
    %4 = vector.broadcast %3 : vector<1x128xf32> to vector<128x128xf32>
    %5 = arith.addf %2, %4 : vector<128x128xf32>
    %cst_5 = arith.constant 0.000000e+00 : f32
    %cst_6 = arith.constant 6.000000e+00 : f32
    %6 = vector.broadcast %cst_5 : f32 to vector<128x128xf32>
    %7 = arith.maximumf %6, %5 : vector<128x128xf32>
    %8 = vector.broadcast %cst_6 : f32 to vector<128x128xf32>
    %9 = arith.minimumf %8, %7 : vector<128x128xf32>
    %10 = arith.truncf %9 : vector<128x128xf32> to vector<128x128xbf16>
    %c0_7 = arith.constant 0 : index
    %c0_8 = arith.constant 0 : index
    %11 = vector.load %arg3[%c0_7, %c0_8] : memref<128x256xbf16, #tpu.memory_space<vmem>>, vector<128x256xbf16>
    %cst_9 = arith.constant dense<0.000000e+00> : vector<128x256xf32>
    %12 = tpu.matmul %10, %11, %cst_9 {dimension_numbers = #tpu.dot_dimension_numbers<[1], [0], [0], [1], [0, 0, 1, 1], [], []>} : vector<128x128xbf16>, vector<128x256xbf16>, vector<128x256xf32> -> vector<128x256xf32>
    %cst_10 = arith.constant dense<0.000000e+00> : vector<256xf32>
    %13 = vector.multi_reduction <add>, %12, %cst_10 [0] : vector<128x256xf32> to vector<256xf32>
    %14 = vector.shape_cast %13 : vector<256xf32> to vector<1x256xf32>
    %15 = arith.mulf %12, %12 : vector<128x256xf32>
    %cst_11 = arith.constant dense<0.000000e+00> : vector<256xf32>
    %16 = vector.multi_reduction <add>, %15, %cst_11 [0] : vector<128x256xf32> to vector<256xf32>
    %17 = vector.shape_cast %16 : vector<256xf32> to vector<1x256xf32>
    %cst_12 = arith.constant 7.812500e-03 : f32
    %18 = vector.broadcast %cst_12 : f32 to vector<1x256xf32>
    %19 = arith.mulf %14, %18 : vector<1x256xf32>
    %cst_13 = arith.constant 7.812500e-03 : f32
    %20 = vector.broadcast %cst_13 : f32 to vector<1x256xf32>
    %21 = arith.mulf %17, %20 : vector<1x256xf32>
    %22 = arith.mulf %19, %19 : vector<1x256xf32>
    %23 = arith.subf %21, %22 : vector<1x256xf32>
    %c0_14 = arith.constant 0 : index
    %c0_15 = arith.constant 0 : index
    %24 = vector.load %arg4[%c0_14, %c0_15] : memref<2x256xf32, #tpu.memory_space<vmem>>, vector<1x256xf32>
    %cst_16 = arith.constant 9.99999974E-6 : f32
    %25 = vector.broadcast %cst_16 : f32 to vector<1x256xf32>
    %26 = arith.addf %23, %25 : vector<1x256xf32>
    %27 = math.rsqrt %26 : vector<1x256xf32>
    %28 = arith.mulf %24, %27 : vector<1x256xf32>
    %c1 = arith.constant 1 : index
    %c0_17 = arith.constant 0 : index
    %29 = vector.load %arg4[%c1, %c0_17] : memref<2x256xf32, #tpu.memory_space<vmem>>, vector<1x256xf32>
    %30 = arith.mulf %19, %28 : vector<1x256xf32>
    %31 = arith.subf %29, %30 : vector<1x256xf32>
    %32 = vector.broadcast %28 : vector<1x256xf32> to vector<128x256xf32>
    %33 = arith.mulf %12, %32 : vector<128x256xf32>
    %34 = vector.broadcast %31 : vector<1x256xf32> to vector<128x256xf32>
    %35 = arith.addf %33, %34 : vector<128x256xf32>
    %cst_18 = arith.constant 0.000000e+00 : f32
    %cst_19 = arith.constant 6.000000e+00 : f32
    %36 = vector.broadcast %cst_18 : f32 to vector<128x256xf32>
    %37 = arith.maximumf %36, %35 : vector<128x256xf32>
    %38 = vector.broadcast %cst_19 : f32 to vector<128x256xf32>
    %39 = arith.minimumf %38, %37 : vector<128x256xf32>
    %40 = arith.truncf %39 : vector<128x256xf32> to vector<128x256xbf16>
    %c0_20 = arith.constant 0 : index
    %c0_21 = arith.constant 0 : index
    %41 = vector.load %arg5[%c0_20, %c0_21] : memref<256x896xbf16, #tpu.memory_space<vmem>>, vector<256x896xbf16>
    %cst_22 = arith.constant dense<0.000000e+00> : vector<128x896xf32>
    %42 = tpu.matmul %40, %41, %cst_22 {dimension_numbers = #tpu.dot_dimension_numbers<[1], [0], [0], [1], [0, 0, 1, 1], [], []>} : vector<128x256xbf16>, vector<256x896xbf16>, vector<128x896xf32> -> vector<128x896xf32>
    %c0_23 = arith.constant 0 : index
    %c0_24 = arith.constant 0 : index
    %43 = vector.load %arg6[%c0_23, %c0_24] : memref<1x896xf32, #tpu.memory_space<vmem>>, vector<1x896xf32>
    %44 = vector.broadcast %43 : vector<1x896xf32> to vector<128x896xf32>
    %45 = arith.addf %42, %44 : vector<128x896xf32>
    %46 = math.tanh %45 : vector<128x896xf32>
    %c0_25 = arith.constant 0 : index
    %c0_26 = arith.constant 0 : index
    %47 = vector.load %arg7[%c0_25, %c0_26] : memref<128x896xf32, #tpu.memory_space<vmem>>, vector<128x896xf32>
    tpu.vector_store %arg7[%c0_25, %c0_26], %46 {strides = array<i32>} : memref<128x896xf32, #tpu.memory_space<vmem>>, vector<128x896xf32>,
    return
  }
}

</mosaic_0001>

<llo_original>
// kernel: tpu_custom_call.1
$region0: #{tpu_custom_call.1}
  #allocation0 [shape = 'u32[]', space=smem, size = 0x4, offset = 0x4, fixed_abs, tag = 'smem constant byte address 0x4 - core index']
  #allocation1 [shape = 'u32[144,128]{1,0:T(1,128)}', space=vmem, size = 0x12000, scoped, tag = 'internal scratch']
  %s0 = inlined_call_operand.hbm [shape: bf16[128,128], index: 0, kind: input, shape index: {}]
  %s1 = inlined_call_operand.hbm [shape: bf16[128,128], index: 1, kind: input, shape index: {}]
  %s2 = inlined_call_operand.vmem [shape: f32[1,128], index: 2, kind: input, shape index: {}]
  %s3 = inlined_call_operand.hbm [shape: bf16[128,256], index: 3, kind: input, shape index: {}]
  %s4 = inlined_call_operand.vmem [shape: f32[2,256], index: 4, kind: input, shape index: {}]
  %s5 = inlined_call_operand.hbm [shape: bf16[256,896], index: 5, kind: input, shape index: {}]
  %s6 = inlined_call_operand.vmem [shape: f32[1,896], index: 6, kind: input, shape index: {}]
  %s7 = inlined_call_operand.hbm [shape: f32[128,896], index: 7, kind: output, shape index: {}]
  %s8 = sld [smem:[#allocation0]]
  $region54: #{tpu_custom_call.1} parent=0
    _
  %s10 = ssub.s32 1, %s8
  %s11 = scalar_select 0, %s10, %s8
  $region1: #{tpu_custom_call.1} parent=0
    #allocation2 [shape = 'u8[32768]{0}', space=vmem, size = 0x8000, scoped, tag = 'input window, operand 0, single buffered']
    #allocation3 [shape = 's32[1]{0}', space=sflag, size = 0x4, scoped, tag = 'scoped memory for tpu_custom_call.1']
    #allocation4 [shape = 's32[1]{0}', space=sflag, size = 0x4, scoped, tag = 'scoped memory for tpu_custom_call.1']
    #allocation5 [shape = 'u8[32768]{0}', space=vmem, size = 0x8000, scoped, tag = 'input window, operand 1, single buffered']
    #allocation6 [shape = 's32[1]{0}', space=sflag, size = 0x4, scoped, tag = 'scoped memory for tpu_custom_call.1']
    #allocation7 [shape = 'u8[65536]{0}', space=vmem, size = 0x10000, scoped, tag = 'input window, operand 3, single buffered']
    #allocation8 [shape = 'u8[458752]{0}', space=vmem, size = 0x70000, scoped, tag = 'input window, operand 5, single buffered']
    #allocation9 [shape = 's32[1]{0}', space=sflag, size = 0x4, scoped, tag = 'scoped memory for tpu_custom_call.1']
    #allocation10 [shape = 'u8[458752]{0}', space=vmem, size = 0x70000, scoped, tag = 'output window, operand 0, single buffered']
    %12 = vsyncpa [#allocation3], 0
    %13 = vsyncpa [#allocation6], 0
    %14 = vsyncpa [#allocation9], 0
    %15 = vsyncpa [#allocation4], 0
    // Predicated region
    $region2: #{tpu_custom_call.1} parent=1 // pred_check
      _
    $region3: #{tpu_custom_call.1} parent=1 // pred_check_branch
      %17 = sbr.rel (0) target = $region5
    $region4: #{tpu_custom_call.1} parent=1 // pred_region
      %s19 = ssub.s32 1024, 1024
      %20 = vsyncadd [#allocation3], %s19
      %s21 = sshll.u32 [#allocation2], 4
      %s22 = int_to_ptr.vmem [resolvable:$true] %s21
      %27 = dma.hbm_to_vmem [thread:$0]  %s0, 1024, %s22, [#allocation3], 64, 64, 4
    $region5: #{tpu_custom_call.1} parent=1 // pred_fallthru
      _
    // Predicated region
    $region6: #{tpu_custom_call.1} parent=1 // pred_check
      _
    $region7: #{tpu_custom_call.1} parent=1 // pred_check_branch
      %29 = sbr.rel (0) target = $region9
    $region8: #{tpu_custom_call.1} parent=1 // pred_region
      %s31 = ssub.s32 1024, 1024
      %32 = vsyncadd [#allocation6], %s31
      %s33 = sshll.u32 [#allocation5], 4
      %s34 = int_to_ptr.vmem [resolvable:$true] %s33
      %39 = dma.hbm_to_vmem [thread:$0]  %s1, 1024, %s34, [#allocation6], 64, 64, 4
    $region9: #{tpu_custom_call.1} parent=1 // pred_fallthru
      _
    // Predicated region
    $region10: #{tpu_custom_call.1} parent=1 // pred_check
      _
    $region11: #{tpu_custom_call.1} parent=1 // pred_check_branch
      %41 = sbr.rel (0) target = $region13
    $region12: #{tpu_custom_call.1} parent=1 // pred_region
      _
    $region13: #{tpu_custom_call.1} parent=1 // pred_fallthru
      _
    // Predicated region
    $region14: #{tpu_custom_call.1} parent=1 // pred_check
      _
    $region15: #{tpu_custom_call.1} parent=1 // pred_check_branch
      %43 = sbr.rel (0) target = $region17
    $region16: #{tpu_custom_call.1} parent=1 // pred_region
      %s45 = ssub.s32 2048, 2048
      %46 = vsyncadd [#allocation6], %s45
      %s47 = sshll.u32 [#allocation7], 4
      %s48 = int_to_ptr.vmem [resolvable:$true] %s47
      %53 = dma.hbm_to_vmem [thread:$0]  %s3, 2048, %s48, [#allocation6], 128, 128, 8
    $region17: #{tpu_custom_call.1} parent=1 // pred_fallthru
      _
    // Predicated region
    $region18: #{tpu_custom_call.1} parent=1 // pred_check
      _
    $region19: #{tpu_custom_call.1} parent=1 // pred_check_branch
      %55 = sbr.rel (0) target = $region21
    $region20: #{tpu_custom_call.1} parent=1 // pred_region
      _
    $region21: #{tpu_custom_call.1} parent=1 // pred_fallthru
      _
    // Predicated region
    $region22: #{tpu_custom_call.1} parent=1 // pred_check
      _
    $region23: #{tpu_custom_call.1} parent=1 // pred_check_branch
      %57 = sbr.rel (0) target = $region25
    $region24: #{tpu_custom_call.1} parent=1 // pred_region
      %s59 = ssub.s32 14336, 14336
      %60 = vsyncadd [#allocation9], %s59
      %s61 = sshll.u32 [#allocation8], 4
      %s62 = int_to_ptr.vmem [resolvable:$true] %s61
      %67 = dma.hbm_to_vmem [thread:$0]  %s5, 14336, %s62, [#allocation9], 448, 448, 28
    $region25: #{tpu_custom_call.1} parent=1 // pred_fallthru
      _
    // Predicated region
    $region26: #{tpu_custom_call.1} parent=1 // pred_check
      _
    $region27: #{tpu_custom_call.1} parent=1 // pred_check_branch
      %69 = sbr.rel (0) target = $region29
    $region28: #{tpu_custom_call.1} parent=1 // pred_region
      _
    $region29: #{tpu_custom_call.1} parent=1 // pred_fallthru
      _
    // Predicated region
    $region30: #{tpu_custom_call.1} parent=1 // pred_check
      _
    $region31: #{tpu_custom_call.1} parent=1 // pred_check_branch
      %71 = sbr.rel (0) target = $region33
    $region32: #{tpu_custom_call.1} parent=1 // pred_region
      %72 = dma.done [#allocation3], 1024
    $region33: #{tpu_custom_call.1} parent=1 // pred_fallthru
      _
    // Predicated region
    $region34: #{tpu_custom_call.1} parent=1 // pred_check
      _
    $region35: #{tpu_custom_call.1} parent=1 // pred_check_branch
      %74 = sbr.rel (0) target = $region37
    $region36: #{tpu_custom_call.1} parent=1 // pred_region
      %75 = dma.done [#allocation6], 1024
    $region37: #{tpu_custom_call.1} parent=1 // pred_fallthru
      _
    // Predicated region
    $region38: #{tpu_custom_call.1} parent=1 // pred_check
      _
    $region39: #{tpu_custom_call.1} parent=1 // pred_check_branch
      %77 = sbr.rel (0) target = $region41
    $region40: #{tpu_custom_call.1} parent=1 // pred_region
      %78 = dma.done [#allocation6], 2048
    $region41: #{tpu_custom_call.1} parent=1 // pred_fallthru
      _
    // Predicated region
    $region42: #{tpu_custom_call.1} parent=1 // pred_check
      _
    $region43: #{tpu_custom_call.1} parent=1 // pred_check_branch
      %80 = sbr.rel (0) target = $region45
    $region44: #{tpu_custom_call.1} parent=1 // pred_region
      %81 = dma.done [#allocation9], 14336
    $region45: #{tpu_custom_call.1} parent=1 // pred_fallthru
      _
    %v83 = vld [vmem:[#allocation2] sm:$0xf]
    %v84 = vld [vmem:[#allocation2 + $0x4] sm:$0xf]
    %v85 = vld [vmem:[#allocation2 + $0x8] sm:$0xf]
    %v86 = vld [vmem:[#allocation2 + $0xc] sm:$0xf]
    %v87 = vld [vmem:[#allocation2 + $0x10] sm:$0xf]
    %v88 = vld [vmem:[#allocation2 + $0x14] sm:$0xf]
    %v89 = vld [vmem:[#allocation2 + $0x18] sm:$0xf]
    %v90 = vld [vmem:[#allocation2 + $0x1c] sm:$0xf]
    %v91 = vld [vmem:[#allocation2 + $0x20] sm:$0xf]
    %v92 = vld [vmem:[#allocation2 + $0x24] sm:$0xf]
    %v93 = vld [vmem:[#allocation2 + $0x28] sm:$0xf]
    %v94 = vld [vmem:[#allocation2 + $0x2c] sm:$0xf]
    %v95 = vld [vmem:[#allocation2 + $0x30] sm:$0xf]
    %v96 = vld [vmem:[#allocation2 + $0x34] sm:$0xf]
    %v97 = vld [vmem:[#allocation2 + $0x38] sm:$0xf]
    %v98 = vld [vmem:[#allocation2 + $0x3c] sm:$0xf]
    %v99 = vld [vmem:[#allocation5] sm:$0xf]
    %v100 = vld [vmem:[#allocation5 + $0x4] sm:$0xf]
    %v101 = vld [vmem:[#allocation5 + $0x8] sm:$0xf]
    %v102 = vld [vmem:[#allocation5 + $0xc] sm:$0xf]
    %v103 = vld [vmem:[#allocation5 + $0x10] sm:$0xf]
    %v104 = vld [vmem:[#allocation5 + $0x14] sm:$0xf]
    %v105 = vld [vmem:[#allocation5 + $0x18] sm:$0xf]
    %v106 = vld [vmem:[#allocation5 + $0x1c] sm:$0xf]
    %v107 = vld [vmem:[#allocation5 + $0x20] sm:$0xf]
    %v108 = vld [vmem:[#allocation5 + $0x24] sm:$0xf]
    %v109 = vld [vmem:[#allocation5 + $0x28] sm:$0xf]
    %v110 = vld [vmem:[#allocation5 + $0x2c] sm:$0xf]
    %v111 = vld [vmem:[#allocation5 + $0x30] sm:$0xf]
    %v112 = vld [vmem:[#allocation5 + $0x34] sm:$0xf]
    %v113 = vld [vmem:[#allocation5 + $0x38] sm:$0xf]
    %v114 = vld [vmem:[#allocation5 + $0x3c] sm:$0xf]
    %v115 = vld [vmem:[%s2] sm:$0x1]
    %v117 = vlaneseq
    %v118 = vshrl.u32 %v117, 7
    %v119 = vsub.s32 0, %v118
    %v120 = vrot.slane %v115, %v119
    %v138 = vunpack.c.l.b16 %v83
    %v139 = vunpack.c.l.b16 %v84
    %v140 = vunpack.c.l.b16 %v85
    %v141 = vunpack.c.l.b16 %v86
    %v142 = vunpack.c.l.b16 %v87
    %v143 = vunpack.c.l.b16 %v88
    %v144 = vunpack.c.l.b16 %v89
    %v145 = vunpack.c.l.b16 %v90
    %v146 = vunpack.c.l.b16 %v91
    %v147 = vunpack.c.l.b16 %v92
    %v148 = vunpack.c.l.b16 %v93
    %v149 = vunpack.c.l.b16 %v94
    %v150 = vunpack.c.l.b16 %v95
    %v151 = vunpack.c.l.b16 %v96
    %v152 = vunpack.c.l.b16 %v97
    %v153 = vunpack.c.l.b16 %v98
    %v154 = vpack.c.b16 %v139, %v138
    %v155 = vpack.c.b16 %v141, %v140
    %v156 = vpack.c.b16 %v143, %v142
    %v157 = vpack.c.b16 %v145, %v144
    %v158 = vpack.c.b16 %v147, %v146
    %v159 = vpack.c.b16 %v149, %v148
    %v160 = vpack.c.b16 %v151, %v150
    %v161 = vpack.c.b16 %v153, %v152
    %v186 = vunpack.c.l.b16 %v99
    %v187 = vunpack.c.l.b16 %v100
    %v188 = vunpack.c.l.b16 %v101
    %v189 = vunpack.c.l.b16 %v102
    %v190 = vunpack.c.l.b16 %v103
    %v191 = vunpack.c.l.b16 %v104
    %v192 = vunpack.c.l.b16 %v105
    %v193 = vunpack.c.l.b16 %v106
    %v194 = vunpack.c.l.b16 %v107
    %v195 = vunpack.c.l.b16 %v108
    %v196 = vunpack.c.l.b16 %v109
    %v197 = vunpack.c.l.b16 %v110
    %v198 = vunpack.c.l.b16 %v111
    %v199 = vunpack.c.l.b16 %v112
    %v200 = vunpack.c.l.b16 %v113
    %v201 = vunpack.c.l.b16 %v114
    %v202 = vpack.c.b16 %v187, %v186
    %v203 = vpack.c.b16 %v189, %v188
    %v204 = vpack.c.b16 %v191, %v190
    %v205 = vpack.c.b16 %v193, %v192
    %v206 = vpack.c.b16 %v195, %v194
    %v207 = vpack.c.b16 %v197, %v196
    %v208 = vpack.c.b16 %v199, %v198
    %v209 = vpack.c.b16 %v201, %v200
    %218 = vmatprep.subr.bf16.mxu0 0
    %219 = vmatpush1.bf16.msra.mxu0 %v202
    %220 = vmatprep.subr.bf16.mxu0 0
    %221 = vmatpush1.bf16.msra.mxu0 %v203
    %222 = vmatprep.subr.bf16.mxu0 0
    %223 = vmatpush1.bf16.msra.mxu0 %v204
    %224 = vmatprep.subr.bf16.mxu0 0
    %225 = vmatpush1.bf16.msra.mxu0 %v205
    %226 = vmatprep.subr.bf16.mxu0 0
    %227 = vmatpush1.bf16.msra.mxu0 %v206
    %228 = vmatprep.subr.bf16.mxu0 0
    %229 = vmatpush1.bf16.msra.mxu0 %v207
    %230 = vmatprep.subr.bf16.mxu0 0
    %231 = vmatpush1.bf16.msra.mxu0 %v208
    %232 = vmatprep.subr.bf16.mxu0 0
    %233 = vmatpush1.bf16.msra.mxu0 %v209
    %234 = vmatprep.subr.bf16.mxu0 0
    %235 = vmatpush1.bf16.msra.mxu0 0
    %236 = vmatprep.subr.bf16.mxu0 0
    %237 = vmatpush1.bf16.msra.mxu0 0
    %238 = vmatprep.subr.bf16.mxu0 0
    %239 = vmatpush1.bf16.msra.mxu0 0
    %240 = vmatprep.subr.bf16.mxu0 0
    %241 = vmatpush1.bf16.msra.mxu0 0
    %242 = vmatprep.subr.bf16.mxu0 0
    %243 = vmatpush1.bf16.msra.mxu0 0
    %244 = vmatprep.subr.bf16.mxu0 0
    %245 = vmatpush1.bf16.msra.mxu0 0
    %246 = vmatprep.subr.bf16.mxu0 0
    %247 = vmatpush1.bf16.msra.mxu0 0
    %248 = vmatprep.subr.bf16.mxu0 0
    %249 = vmatpush1.bf16.msra.mxu0 0
    %250 = vmatprep.mubr.bf16.mxu0 0
    %251 = vmatmul.mubr.bf16.gmra.mrb[0].mxu0 %v154
    %v252 = vpop.f32.mrb[0].mxu0
    %v253 = vadd.f32 %v120, %v252
    %v254 = vpop.f32.mrb[0].mxu0
    %v255 = vpop.f32.mrb[0].mxu0
    %v256 = vadd.f32 %v120, %v255
    %v257 = vpop.f32.mrb[0].mxu0
    %258 = vmatprep.mubr.bf16.mxu0 0
    %259 = vmatmul.mubr.bf16.gmra.mrb[0].mxu0 %v155
    %v260 = vpop.f32.mrb[0].mxu0
    %v261 = vadd.f32 %v120, %v260
    %v262 = vpop.f32.mrb[0].mxu0
    %v263 = vpop.f32.mrb[0].mxu0
    %v264 = vadd.f32 %v120, %v263
    %v265 = vpop.f32.mrb[0].mxu0
    %266 = vmatprep.mubr.bf16.mxu0 0
    %267 = vmatmul.mubr.bf16.gmra.mrb[0].mxu0 %v156
    %v268 = vpop.f32.mrb[0].mxu0
    %v269 = vadd.f32 %v120, %v268
    %v270 = vpop.f32.mrb[0].mxu0
    %v271 = vpop.f32.mrb[0].mxu0
    %v272 = vadd.f32 %v120, %v271
    %v273 = vpop.f32.mrb[0].mxu0
    %274 = vmatprep.mubr.bf16.mxu0 0
    %275 = vmatmul.mubr.bf16.gmra.mrb[0].mxu0 %v157
    %v276 = vpop.f32.mrb[0].mxu0
    %v277 = vadd.f32 %v120, %v276
    %v278 = vpop.f32.mrb[0].mxu0
    %v279 = vpop.f32.mrb[0].mxu0
    %v280 = vadd.f32 %v120, %v279
    %v281 = vpop.f32.mrb[0].mxu0
    %282 = vmatprep.mubr.bf16.mxu0 0
    %283 = vmatmul.mubr.bf16.gmra.mrb[0].mxu0 %v158
    %v284 = vpop.f32.mrb[0].mxu0
    %v285 = vadd.f32 %v120, %v284
    %v286 = vpop.f32.mrb[0].mxu0
    %v287 = vpop.f32.mrb[0].mxu0
    %v288 = vadd.f32 %v120, %v287
    %v289 = vpop.f32.mrb[0].mxu0
    %290 = vmatprep.mubr.bf16.mxu0 0
    %291 = vmatmul.mubr.bf16.gmra.mrb[0].mxu0 %v159
    %v292 = vpop.f32.mrb[0].mxu0
    %v293 = vadd.f32 %v120, %v292
    %v294 = vpop.f32.mrb[0].mxu0
    %v295 = vpop.f32.mrb[0].mxu0
    %v296 = vadd.f32 %v120, %v295
    %v297 = vpop.f32.mrb[0].mxu0
    %298 = vmatprep.mubr.bf16.mxu0 0
    %299 = vmatmul.mubr.bf16.gmra.mrb[0].mxu0 %v160
    %v300 = vpop.f32.mrb[0].mxu0
    %v301 = vadd.f32 %v120, %v300
    %v302 = vpop.f32.mrb[0].mxu0
    %v303 = vpop.f32.mrb[0].mxu0
    %v304 = vadd.f32 %v120, %v303
    %v305 = vpop.f32.mrb[0].mxu0
    %306 = vmatprep.mubr.bf16.mxu0 0
    %307 = vmatmul.mubr.bf16.gmra.mrb[0].mxu0 %v161
    %v308 = vpop.f32.mrb[0].mxu0
    %v309 = vadd.f32 %v120, %v308
    %v310 = vpop.f32.mrb[0].mxu0
    %v311 = vpop.f32.mrb[0].mxu0
    %v312 = vadd.f32 %v120, %v311
    %v313 = vpop.f32.mrb[0].mxu0
    %314 = vdwg.mxu0
    %v315 = vmax.f32 %v253, 0.0
    %v316 = vmax.f32 %v256, 0.0
    %v317 = vmax.f32 %v261, 0.0
    %v318 = vmax.f32 %v264, 0.0
    %v319 = vmax.f32 %v269, 0.0
    %v320 = vmax.f32 %v272, 0.0
    %v321 = vmax.f32 %v277, 0.0
    %v322 = vmax.f32 %v280, 0.0
    %v323 = vmax.f32 %v285, 0.0
    %v324 = vmax.f32 %v288, 0.0
    %v325 = vmax.f32 %v293, 0.0
    %v326 = vmax.f32 %v296, 0.0
    %v327 = vmax.f32 %v301, 0.0
    %v328 = vmax.f32 %v304, 0.0
    %v329 = vmax.f32 %v309, 0.0
    %v330 = vmax.f32 %v312, 0.0
    %v331 = vmin.f32 %v315, 6.0
    %v332 = vmin.f32 %v316, 6.0
    %v333 = vmin.f32 %v317, 6.0
    %v334 = vmin.f32 %v318, 6.0
    %v335 = vmin.f32 %v319, 6.0
    %v336 = vmin.f32 %v320, 6.0
    %v337 = vmin.f32 %v321, 6.0
    %v338 = vmin.f32 %v322, 6.0
    %v339 = vmin.f32 %v323, 6.0
    %v340 = vmin.f32 %v324, 6.0
    %v341 = vmin.f32 %v325, 6.0
    %v342 = vmin.f32 %v326, 6.0
    %v343 = vmin.f32 %v327, 6.0
    %v344 = vmin.f32 %v328, 6.0
    %v345 = vmin.f32 %v329, 6.0
    %v346 = vmin.f32 %v330, 6.0
    %v347 = vpack.c.bf16 %v332, %v331
    %v348 = vpack.c.bf16 %v334, %v333
    %v349 = vpack.c.bf16 %v336, %v335
    %v350 = vpack.c.bf16 %v338, %v337
    %v351 = vpack.c.bf16 %v340, %v339
    %v352 = vpack.c.bf16 %v342, %v341
    %v353 = vpack.c.bf16 %v344, %v343
    %v354 = vpack.c.bf16 %v346, %v345
    %v355 = vld [vmem:[#allocation7] sm:$0xff]
    %v356 = vld [vmem:[#allocation7 + $0x8] sm:$0xff]
    %v357 = vld [vmem:[#allocation7 + $0x10] sm:$0xff]
    %v358 = vld [vmem:[#allocation7 + $0x18] sm:$0xff]
    %v359 = vld [vmem:[#allocation7 + $0x20] sm:$0xff]
    %v360 = vld [vmem:[#allocation7 + $0x28] sm:$0xff]
    %v361 = vld [vmem:[#allocation7 + $0x30] sm:$0xff]
    %v362 = vld [vmem:[#allocation7 + $0x38] sm:$0xff]
    %v363 = vld [vmem:[#allocation7 + $0x40] sm:$0xff]
    %v364 = vld [vmem:[#allocation7 + $0x48] sm:$0xff]
    %v365 = vld [vmem:[#allocation7 + $0x50] sm:$0xff]
    %v366 = vld [vmem:[#allocation7 + $0x58] sm:$0xff]
    %v367 = vld [vmem:[#allocation7 + $0x60] sm:$0xff]
    %v368 = vld [vmem:[#allocation7 + $0x68] sm:$0xff]
    %v369 = vld [vmem:[#allocation7 + $0x70] sm:$0xff]
    %v370 = vld [vmem:[#allocation7 + $0x78] sm:$0xff]
    %v387 = vunpack.c.l.b16 %v355
    %v388 = vunpack.c.h.b16 %v355
    %v389 = vunpack.c.l.b16 %v356
    %v390 = vunpack.c.h.b16 %v356
    %v391 = vunpack.c.l.b16 %v357
    %v392 = vunpack.c.h.b16 %v357
    %v393 = vunpack.c.l.b16 %v358
    %v394 = vunpack.c.h.b16 %v358
    %v395 = vunpack.c.l.b16 %v359
    %v396 = vunpack.c.h.b16 %v359
    %v397 = vunpack.c.l.b16 %v360
    %v398 = vunpack.c.h.b16 %v360
    %v399 = vunpack.c.l.b16 %v361
    %v400 = vunpack.c.h.b16 %v361
    %v401 = vunpack.c.l.b16 %v362
    %v402 = vunpack.c.h.b16 %v362
    %v403 = vunpack.c.l.b16 %v363
    %v404 = vunpack.c.h.b16 %v363
    %v405 = vunpack.c.l.b16 %v364
    %v406 = vunpack.c.h.b16 %v364
    %v407 = vunpack.c.l.b16 %v365
    %v408 = vunpack.c.h.b16 %v365
    %v409 = vunpack.c.l.b16 %v366
    %v410 = vunpack.c.h.b16 %v366
    %v411 = vunpack.c.l.b16 %v367
    %v412 = vunpack.c.h.b16 %v367
    %v413 = vunpack.c.l.b16 %v368
    %v414 = vunpack.c.h.b16 %v368
    %v415 = vunpack.c.l.b16 %v369
    %v416 = vunpack.c.h.b16 %v369
    %v417 = vunpack.c.l.b16 %v370
    %v418 = vunpack.c.h.b16 %v370
    %v419 = vpack.c.b16 %v389, %v387
    %v420 = vpack.c.b16 %v390, %v388
    %v421 = vpack.c.b16 %v393, %v391
    %v422 = vpack.c.b16 %v394, %v392
    %v423 = vpack.c.b16 %v397, %v395
    %v424 = vpack.c.b16 %v398, %v396
    %v425 = vpack.c.b16 %v401, %v399
    %v426 = vpack.c.b16 %v402, %v400
    %v427 = vpack.c.b16 %v405, %v403
    %v428 = vpack.c.b16 %v406, %v404
    %v429 = vpack.c.b16 %v409, %v407
    %v430 = vpack.c.b16 %v410, %v408
    %v431 = vpack.c.b16 %v413, %v411
    %v432 = vpack.c.b16 %v414, %v412
    %v433 = vpack.c.b16 %v417, %v415
    %v434 = vpack.c.b16 %v418, %v416
    %451 = vmatprep.subr.bf16.mxu0 %v420
    %452 = vmatpush1.bf16.msra.mxu0 %v419
    %453 = vmatprep.subr.bf16.mxu0 %v422
    %454 = vmatpush1.bf16.msra.mxu0 %v421
    %455 = vmatprep.subr.bf16.mxu0 %v424
    %456 = vmatpush1.bf16.msra.mxu0 %v423
    %457 = vmatprep.subr.bf16.mxu0 %v426
    %458 = vmatpush1.bf16.msra.mxu0 %v425
    %459 = vmatprep.subr.bf16.mxu0 %v428
    %460 = vmatpush1.bf16.msra.mxu0 %v427
    %461 = vmatprep.subr.bf16.mxu0 %v430
    %462 = vmatpush1.bf16.msra.mxu0 %v429
    %463 = vmatprep.subr.bf16.mxu0 %v432
    %464 = vmatpush1.bf16.msra.mxu0 %v431
    %465 = vmatprep.subr.bf16.mxu0 %v434
    %466 = vmatpush1.bf16.msra.mxu0 %v433
    %467 = vmatprep.subr.bf16.mxu0 0
    %468 = vmatpush1.bf16.msra.mxu0 0
    %469 = vmatprep.subr.bf16.mxu0 0
    %470 = vmatpush1.bf16.msra.mxu0 0
    %471 = vmatprep.subr.bf16.mxu0 0
    %472 = vmatpush1.bf16.msra.mxu0 0
    %473 = vmatprep.subr.bf16.mxu0 0
    %474 = vmatpush1.bf16.msra.mxu0 0
    %475 = vmatprep.subr.bf16.mxu0 0
    %476 = vmatpush1.bf16.msra.mxu0 0
    %477 = vmatprep.subr.bf16.mxu0 0
    %478 = vmatpush1.bf16.msra.mxu0 0
    %479 = vmatprep.subr.bf16.mxu0 0
    %480 = vmatpush1.bf16.msra.mxu0 0
    %481 = vmatprep.subr.bf16.mxu0 0
    %482 = vmatpush1.bf16.msra.mxu0 0
    %483 = vmatprep.mubr.bf16.mxu0 0
    %484 = vmatmul.mubr.bf16.gmra.mrb[0].mxu0 %v347
    %v485 = vpop.f32.mrb[0].mxu0
    %v486 = vadd.f32 0.0, %v485
    %v487 = vpop.f32.mrb[0].mxu0
    %v488 = vadd.f32 0.0, %v487
    %v489 = vpop.f32.mrb[0].mxu0
    %v490 = vadd.f32 0.0, %v489
    %v491 = vpop.f32.mrb[0].mxu0
    %v492 = vadd.f32 0.0, %v491
    %493 = vmatprep.mubr.bf16.mxu0 0
    %494 = vmatmul.mubr.bf16.gmra.mrb[0].mxu0 %v348
    %v495 = vpop.f32.mrb[0].mxu0
    %v496 = vadd.f32 0.0, %v495
    %v497 = vpop.f32.mrb[0].mxu0
    %v498 = vadd.f32 0.0, %v497
    %v499 = vpop.f32.mrb[0].mxu0
    %v500 = vadd.f32 0.0, %v499
    %v501 = vpop.f32.mrb[0].mxu0
    %v502 = vadd.f32 0.0, %v501
    %503 = vmatprep.mubr.bf16.mxu0 0
    %504 = vmatmul.mubr.bf16.gmra.mrb[0].mxu0 %v349
    %v505 = vpop.f32.mrb[0].mxu0
    %v506 = vadd.f32 0.0, %v505
    %v507 = vpop.f32.mrb[0].mxu0
    %v508 = vadd.f32 0.0, %v507
    %v509 = vpop.f32.mrb[0].mxu0
    %v510 = vadd.f32 0.0, %v509
    %v511 = vpop.f32.mrb[0].mxu0
    %v512 = vadd.f32 0.0, %v511
    %513 = vmatprep.mubr.bf16.mxu0 0
    %514 = vmatmul.mubr.bf16.gmra.mrb[0].mxu0 %v350
    %v515 = vpop.f32.mrb[0].mxu0
    %v516 = vadd.f32 0.0, %v515
    %v517 = vpop.f32.mrb[0].mxu0
    %v518 = vadd.f32 0.0, %v517
    %v519 = vpop.f32.mrb[0].mxu0
    %v520 = vadd.f32 0.0, %v519
    %v521 = vpop.f32.mrb[0].mxu0
    %v522 = vadd.f32 0.0, %v521
    %523 = vmatprep.mubr.bf16.mxu0 0
    %524 = vmatmul.mubr.bf16.gmra.mrb[0].mxu0 %v351
    %v525 = vpop.f32.mrb[0].mxu0
    %v526 = vadd.f32 0.0, %v525
    %v527 = vpop.f32.mrb[0].mxu0
    %v528 = vadd.f32 0.0, %v527
    %v529 = vpop.f32.mrb[0].mxu0
    %v530 = vadd.f32 0.0, %v529
    %v531 = vpop.f32.mrb[0].mxu0
    %v532 = vadd.f32 0.0, %v531
    %533 = vmatprep.mubr.bf16.mxu0 0
    %534 = vmatmul.mubr.bf16.gmra.mrb[0].mxu0 %v352
    %v535 = vpop.f32.mrb[0].mxu0
    %v536 = vadd.f32 0.0, %v535
    %v537 = vpop.f32.mrb[0].mxu0
    %v538 = vadd.f32 0.0, %v537
    %v539 = vpop.f32.mrb[0].mxu0
    %v540 = vadd.f32 0.0, %v539
    %v541 = vpop.f32.mrb[0].mxu0
    %v542 = vadd.f32 0.0, %v541
    %543 = vmatprep.mubr.bf16.mxu0 0
    %544 = vmatmul.mubr.bf16.gmra.mrb[0].mxu0 %v353
    %v545 = vpop.f32.mrb[0].mxu0
    %v546 = vadd.f32 0.0, %v545
    %v547 = vpop.f32.mrb[0].mxu0
    %v548 = vadd.f32 0.0, %v547
    %v549 = vpop.f32.mrb[0].mxu0
    %v550 = vadd.f32 0.0, %v549
    %v551 = vpop.f32.mrb[0].mxu0
    %v552 = vadd.f32 0.0, %v551
    %553 = vmatprep.mubr.bf16.mxu0 0
    %554 = vmatmul.mubr.bf16.gmra.mrb[0].mxu0 %v354
    %v555 = vpop.f32.mrb[0].mxu0
    %v556 = vadd.f32 0.0, %v555
    %v557 = vpop.f32.mrb[0].mxu0
    %v558 = vadd.f32 0.0, %v557
    %v559 = vpop.f32.mrb[0].mxu0
    %v560 = vadd.f32 0.0, %v559
    %v561 = vpop.f32.mrb[0].mxu0
    %v562 = vadd.f32 0.0, %v561
    %563 = vdwg.mxu0
    %v564 = vadd.f32 %v486, %v490
    %v565 = vadd.f32 %v564, %v496
    %v566 = vadd.f32 %v565, %v500
    %v567 = vadd.f32 %v566, %v506
    %v568 = vadd.f32 %v567, %v510
    %v569 = vadd.f32 %v568, %v516
    %v570 = vadd.f32 %v569, %v520
    %v571 = vadd.f32 %v570, %v526
    %v572 = vadd.f32 %v571, %v530
    %v573 = vadd.f32 %v572, %v536
    %v574 = vadd.f32 %v573, %v540
    %v575 = vadd.f32 %v574, %v546
    %v576 = vadd.f32 %v575, %v550
    %v577 = vadd.f32 %v576, %v556
    %v578 = vadd.f32 %v577, %v560
    %v579 = vrot.slane %v578, 4
    %v580 = vadd.f32 %v578, %v579
    %v581 = vrot.slane %v580, 2
    %v582 = vadd.f32 %v580, %v581
    %v583 = vrot.slane %v582, 1
    %v584 = vadd.f32 %v582, %v583
    %v585 = vadd.f32 %v488, %v492
    %v586 = vadd.f32 %v585, %v498
    %v587 = vadd.f32 %v586, %v502
    %v588 = vadd.f32 %v587, %v508
    %v589 = vadd.f32 %v588, %v512
    %v590 = vadd.f32 %v589, %v518
    %v591 = vadd.f32 %v590, %v522
    %v592 = vadd.f32 %v591, %v528
    %v593 = vadd.f32 %v592, %v532
    %v594 = vadd.f32 %v593, %v538
    %v595 = vadd.f32 %v594, %v542
    %v596 = vadd.f32 %v595, %v548
    %v597 = vadd.f32 %v596, %v552
    %v598 = vadd.f32 %v597, %v558
    %v599 = vadd.f32 %v598, %v562
    %v600 = vrot.slane %v599, 4
    %v601 = vadd.f32 %v599, %v600
    %v602 = vrot.slane %v601, 2
    %v603 = vadd.f32 %v601, %v602
    %v604 = vrot.slane %v603, 1
    %v605 = vadd.f32 %v603, %v604
    %v606 = vmul.f32 %v486, %v486
    %v607 = vmul.f32 %v488, %v488
    %v608 = vmul.f32 %v490, %v490
    %v609 = vmul.f32 %v492, %v492
    %v610 = vmul.f32 %v496, %v496
    %v611 = vmul.f32 %v498, %v498
    %v612 = vmul.f32 %v500, %v500
    %v613 = vmul.f32 %v502, %v502
    %v614 = vmul.f32 %v506, %v506
    %v615 = vmul.f32 %v508, %v508
    %v616 = vmul.f32 %v510, %v510
    %v617 = vmul.f32 %v512, %v512
    %v618 = vmul.f32 %v516, %v516
    %v619 = vmul.f32 %v518, %v518
    %v620 = vmul.f32 %v520, %v520
    %v621 = vmul.f32 %v522, %v522
    %v622 = vmul.f32 %v526, %v526
    %v623 = vmul.f32 %v528, %v528
    %v624 = vmul.f32 %v530, %v530
    %v625 = vmul.f32 %v532, %v532
    %v626 = vmul.f32 %v536, %v536
    %v627 = vmul.f32 %v538, %v538
    %v628 = vmul.f32 %v540, %v540
    %v629 = vmul.f32 %v542, %v542
    %v630 = vmul.f32 %v546, %v546
    %v631 = vmul.f32 %v548, %v548
    %v632 = vmul.f32 %v550, %v550
    %v633 = vmul.f32 %v552, %v552
    %v634 = vmul.f32 %v556, %v556
    %v635 = vmul.f32 %v558, %v558
    %v636 = vmul.f32 %v560, %v560
    %v637 = vmul.f32 %v562, %v562
    %v638 = vadd.f32 %v606, %v608
    %v639 = vadd.f32 %v638, %v610
    %v640 = vadd.f32 %v639, %v612
    %v641 = vadd.f32 %v640, %v614
    %v642 = vadd.f32 %v641, %v616
    %v643 = vadd.f32 %v642, %v618
    %v644 = vadd.f32 %v643, %v620
    %v645 = vadd.f32 %v644, %v622
    %v646 = vadd.f32 %v645, %v624
    %v647 = vadd.f32 %v646, %v626
    %v648 = vadd.f32 %v647, %v628
    %v649 = vadd.f32 %v648, %v630
    %v650 = vadd.f32 %v649, %v632
    %v651 = vadd.f32 %v650, %v634
    %v652 = vadd.f32 %v651, %v636
    %v653 = vrot.slane %v652, 4
    %v654 = vadd.f32 %v652, %v653
    %v655 = vrot.slane %v654, 2
    %v656 = vadd.f32 %v654, %v655
    %v657 = vrot.slane %v656, 1
    %v658 = vadd.f32 %v656, %v657
    %v659 = vadd.f32 %v607, %v609
    %v660 = vadd.f32 %v659, %v611
    %v661 = vadd.f32 %v660, %v613
    %v662 = vadd.f32 %v661, %v615
    %v663 = vadd.f32 %v662, %v617
    %v664 = vadd.f32 %v663, %v619
    %v665 = vadd.f32 %v664, %v621
    %v666 = vadd.f32 %v665, %v623
    %v667 = vadd.f32 %v666, %v625
    %v668 = vadd.f32 %v667, %v627
    %v669 = vadd.f32 %v668, %v629
    %v670 = vadd.f32 %v669, %v631
    %v671 = vadd.f32 %v670, %v633
    %v672 = vadd.f32 %v671, %v635
    %v673 = vadd.f32 %v672, %v637
    %v674 = vrot.slane %v673, 4
    %v675 = vadd.f32 %v673, %v674
    %v676 = vrot.slane %v675, 2
    %v677 = vadd.f32 %v675, %v676
    %v678 = vrot.slane %v677, 1
    %v679 = vadd.f32 %v677, %v678
    %v680 = vmul.f32 %v584, 0.0078125
    %v681 = vmul.f32 %v605, 0.0078125
    %v682 = vmul.f32 %v658, 0.0078125
    %v683 = vmul.f32 %v679, 0.0078125
    %v684 = vmul.f32 %v680, %v680
    %v685 = vmul.f32 %v681, %v681
    %v686 = vsub.f32 %v682, %v684
    %v687 = vsub.f32 %v683, %v685
    %v688 = vld [vmem:[%s4] ss:$2 sm:$0x3]
    %v689 = vadd.f32 %v686, 1e-05
    %v690 = vadd.f32 %v687, 1e-05
    %v691 = vrsqrt.pop %v689
    %v692 = vrsqrt.pop %v690
    %v695 = vcombine.low %v691, %v692
    %v697 = vunpack.c.l.s4 1966171168
    %v698 = vunpack.c.0.s8 %v697
    %v699 = vlaneseq
    %v700 = vshrl.u32 %v699, 7
    %v701 = vsub.s32 %v698, %v700
    %v702 = vrot.slane %v695, %v701
    %v704 = vunpack.c.l.s4 1966171168
    %v705 = vunpack.c.0.s8 %v704
    %v706 = vlaneseq
    %v707 = vshrl.u32 %v706, 7
    %v708 = vsub.s32 %v705, %v707
    %v709 = vrot.slane %v702, %v708
    %v711 = vmul.f32 %v688, %v709
    %s712 = scalar_lea.vmem %s4, 1
    %v713 = vld [vmem:[%s712] ss:$2 sm:$0x3]
    %v715 = vlaneseq
    %v716 = vshrl.u32 %v715, 7
    %v717 = vsub.s32 0, %v716
    %v718 = vrot.slane %v711, %v717
    %v719 = vlaneseq
    %v720 = vshrl.u32 %v719, 7
    %v721 = vsub.s32 1, %v720
    %v722 = vrot.slane %v711, %v721
    %v725 = vmul.f32 %v680, %v718
    %v726 = vmul.f32 %v681, %v722
    %v729 = vcombine.low %v725, %v726
    %v731 = vunpack.c.l.s4 1966171168
    %v732 = vunpack.c.0.s8 %v731
    %v733 = vlaneseq
    %v734 = vshrl.u32 %v733, 7
    %v735 = vsub.s32 %v732, %v734
    %v736 = vrot.slane %v729, %v735
    %v738 = vunpack.c.l.s4 1966171168
    %v739 = vunpack.c.0.s8 %v738
    %v740 = vlaneseq
    %v741 = vshrl.u32 %v740, 7
    %v742 = vsub.s32 %v739, %v741
    %v743 = vrot.slane %v736, %v742
    %v745 = vsub.f32 %v713, %v743
    %v746 = vmul.f32 %v486, %v718
    %v747 = vmul.f32 %v488, %v722
    %v748 = vmul.f32 %v490, %v718
    %v749 = vmul.f32 %v492, %v722
    %v750 = vmul.f32 %v496, %v718
    %v751 = vmul.f32 %v498, %v722
    %v752 = vmul.f32 %v500, %v718
    %v753 = vmul.f32 %v502, %v722
    %v754 = vmul.f32 %v506, %v718
    %v755 = vmul.f32 %v508, %v722
    %v756 = vmul.f32 %v510, %v718
    %v757 = vmul.f32 %v512, %v722
    %v758 = vmul.f32 %v516, %v718
    %v759 = vmul.f32 %v518, %v722
    %v760 = vmul.f32 %v520, %v718
    %v761 = vmul.f32 %v522, %v722
    %v762 = vmul.f32 %v526, %v718
    %v763 = vmul.f32 %v528, %v722
    %v764 = vmul.f32 %v530, %v718
    %v765 = vmul.f32 %v532, %v722
    %v766 = vmul.f32 %v536, %v718
    %v767 = vmul.f32 %v538, %v722
    %v768 = vmul.f32 %v540, %v718
    %v769 = vmul.f32 %v542, %v722
    %v770 = vmul.f32 %v546, %v718
    %v771 = vmul.f32 %v548, %v722
    %v772 = vmul.f32 %v550, %v718
    %v773 = vmul.f32 %v552, %v722
    %v774 = vmul.f32 %v556, %v718
    %v775 = vmul.f32 %v558, %v722
    %v776 = vmul.f32 %v560, %v718
    %v777 = vmul.f32 %v562, %v722
    %v779 = vlaneseq
    %v780 = vshrl.u32 %v779, 7
    %v781 = vsub.s32 0, %v780
    %v782 = vrot.slane %v745, %v781
    %v783 = vlaneseq
    %v784 = vshrl.u32 %v783, 7
    %v785 = vsub.s32 1, %v784
    %v786 = vrot.slane %v745, %v785
    %v789 = vadd.f32 %v746, %v782
    %v790 = vadd.f32 %v747, %v786
    %v791 = vadd.f32 %v748, %v782
    %v792 = vadd.f32 %v749, %v786
    %v793 = vadd.f32 %v750, %v782
    %v794 = vadd.f32 %v751, %v786
    %v795 = vadd.f32 %v752, %v782
    %v796 = vadd.f32 %v753, %v786
    %v797 = vadd.f32 %v754, %v782
    %v798 = vadd.f32 %v755, %v786
    %v799 = vadd.f32 %v756, %v782
    %v800 = vadd.f32 %v757, %v786
    %v801 = vadd.f32 %v758, %v782
    %v802 = vadd.f32 %v759, %v786
    %v803 = vadd.f32 %v760, %v782
    %v804 = vadd.f32 %v761, %v786
    %v805 = vadd.f32 %v762, %v782
    %v806 = vadd.f32 %v763, %v786
    %v807 = vadd.f32 %v764, %v782
    %v808 = vadd.f32 %v765, %v786
    %v809 = vadd.f32 %v766, %v782
    %v810 = vadd.f32 %v767, %v786
    %v811 = vadd.f32 %v768, %v782
    %v812 = vadd.f32 %v769, %v786
    %v813 = vadd.f32 %v770, %v782
    %v814 = vadd.f32 %v771, %v786
    %v815 = vadd.f32 %v772, %v782
    %v816 = vadd.f32 %v773, %v786
    %v817 = vadd.f32 %v774, %v782
    %v818 = vadd.f32 %v775, %v786
    %v819 = vadd.f32 %v776, %v782
    %v820 = vadd.f32 %v777, %v786
    %v821 = vmax.f32 %v789, 0.0
    %v822 = vmax.f32 %v790, 0.0
    %v823 = vmax.f32 %v791, 0.0
    %v824 = vmax.f32 %v792, 0.0
    %v825 = vmax.f32 %v793, 0.0
    %v826 = vmax.f32 %v794, 0.0
    %v827 = vmax.f32 %v795, 0.0
    %v828 = vmax.f32 %v796, 0.0
    %v829 = vmax.f32 %v797, 0.0
    %v830 = vmax.f32 %v798, 0.0
    %v831 = vmax.f32 %v799, 0.0
    %v832 = vmax.f32 %v800, 0.0
    %v833 = vmax.f32 %v801, 0.0
    %v834 = vmax.f32 %v802, 0.0
    %v835 = vmax.f32 %v803, 0.0
    %v836 = vmax.f32 %v804, 0.0
    %v837 = vmax.f32 %v805, 0.0
    %v838 = vmax.f32 %v806, 0.0
    %v839 = vmax.f32 %v807, 0.0
    %v840 = vmax.f32 %v808, 0.0
    %v841 = vmax.f32 %v809, 0.0
    %v842 = vmax.f32 %v810, 0.0
    %v843 = vmax.f32 %v811, 0.0
    %v844 = vmax.f32 %v812, 0.0
    %v845 = vmax.f32 %v813, 0.0
    %v846 = vmax.f32 %v814, 0.0
    %v847 = vmax.f32 %v815, 0.0
    %v848 = vmax.f32 %v816, 0.0
    %v849 = vmax.f32 %v817, 0.0
    %v850 = vmax.f32 %v818, 0.0
    %v851 = vmax.f32 %v819, 0.0
    %v852 = vmax.f32 %v820, 0.0
    %v853 = vmin.f32 %v821, 6.0
    %v854 = vmin.f32 %v822, 6.0
    %v855 = vmin.f32 %v823, 6.0
    %v856 = vmin.f32 %v824, 6.0
    %v857 = vmin.f32 %v825, 6.0
    %v858 = vmin.f32 %v826, 6.0
    %v859 = vmin.f32 %v827, 6.0
    %v860 = vmin.f32 %v828, 6.0
    %v861 = vmin.f32 %v829, 6.0
    %v862 = vmin.f32 %v830, 6.0
    %v863 = vmin.f32 %v831, 6.0
    %v864 = vmin.f32 %v832, 6.0
    %v865 = vmin.f32 %v833, 6.0
    %v866 = vmin.f32 %v834, 6.0
    %v867 = vmin.f32 %v835, 6.0
    %v868 = vmin.f32 %v836, 6.0
    %v869 = vmin.f32 %v837, 6.0
    %v870 = vmin.f32 %v838, 6.0
    %v871 = vmin.f32 %v839, 6.0
    %v872 = vmin.f32 %v840, 6.0
    %v873 = vmin.f32 %v841, 6.0
    %v874 = vmin.f32 %v842, 6.0
    %v875 = vmin.f32 %v843, 6.0
    %v876 = vmin.f32 %v844, 6.0
    %v877 = vmin.f32 %v845, 6.0
    %v878 = vmin.f32 %v846, 6.0
    %v879 = vmin.f32 %v847, 6.0
    %v880 = vmin.f32 %v848, 6.0
    %v881 = vmin.f32 %v849, 6.0
    %v882 = vmin.f32 %v850, 6.0
    %v883 = vmin.f32 %v851, 6.0
    %v884 = vmin.f32 %v852, 6.0
    %v885 = vpack.c.bf16 %v855, %v853
    %v886 = vpack.c.bf16 %v856, %v854
    %v887 = vpack.c.bf16 %v859, %v857
    %v888 = vpack.c.bf16 %v860, %v858
    %v889 = vpack.c.bf16 %v863, %v861
    %v890 = vpack.c.bf16 %v864, %v862
    %v891 = vpack.c.bf16 %v867, %v865
    %v892 = vpack.c.bf16 %v868, %v866
    %v893 = vpack.c.bf16 %v871, %v869
    %v894 = vpack.c.bf16 %v872, %v870
    %v895 = vpack.c.bf16 %v875, %v873
    %v896 = vpack.c.bf16 %v876, %v874
    %v897 = vpack.c.bf16 %v879, %v877
    %v898 = vpack.c.bf16 %v880, %v878
    %v899 = vpack.c.bf16 %v883, %v881
    %v900 = vpack.c.bf16 %v884, %v882
    %v901 = vld [vmem:[#allocation8] sm:$0xff]
    %v902 = vld [vmem:[#allocation8 + $0x8] sm:$0xff]
    %v903 = vld [vmem:[#allocation8 + $0x10] sm:$0xff]
    %v904 = vld [vmem:[#allocation8 + $0x18] sm:$0xf]
    %v905 = vld [vmem:[#allocation8 + $0x1c] sm:$0xff]
    %v906 = vld [vmem:[#allocation8 + $0x24] sm:$0xff]
    %v907 = vld [vmem:[#allocation8 + $0x2c] sm:$0xff]
    %v908 = vld [vmem:[#allocation8 + $0x34] sm:$0xf]
    %v909 = vld [vmem:[#allocation8 + $0x38] sm:$0xff]
    %v910 = vld [vmem:[#allocation8 + $0x40] sm:$0xff]
    %v911 = vld [vmem:[#allocation8 + $0x48] sm:$0xff]
    %v912 = vld [vmem:[#allocation8 + $0x50] sm:$0xf]
    %v913 = vld [vmem:[#allocation8 + $0x54] sm:$0xff]
    %v914 = vld [vmem:[#allocation8 + $0x5c] sm:$0xff]
    %v915 = vld [vmem:[#allocation8 + $0x64] sm:$0xff]
    %v916 = vld [vmem:[#allocation8 + $0x6c] sm:$0xf]
    %v917 = vld [vmem:[#allocation8 + $0x70] sm:$0xff]
    %v918 = vld [vmem:[#allocation8 + $0x78] sm:$0xff]
    %v919 = vld [vmem:[#allocation8 + $0x80] sm:$0xff]
    %v920 = vld [vmem:[#allocation8 + $0x88] sm:$0xf]
    %v921 = vld [vmem:[#allocation8 + $0x8c] sm:$0xff]
    %v922 = vld [vmem:[#allocation8 + $0x94] sm:$0xff]
    %v923 = vld [vmem:[#allocation8 + $0x9c] sm:$0xff]
    %v924 = vld [vmem:[#allocation8 + $0xa4] sm:$0xf]
    %v925 = vld [vmem:[#allocation8 + $0xa8] sm:$0xff]
    %v926 = vld [vmem:[#allocation8 + $0xb0] sm:$0xff]
    %v927 = vld [vmem:[#allocation8 + $0xb8] sm:$0xff]
    %v928 = vld [vmem:[#allocation8 + $0xc0] sm:$0xf]
    %v929 = vld [vmem:[#allocation8 + $0xc4] sm:$0xff]
    %v930 = vld [vmem:[#allocation8 + $0xcc] sm:$0xff]
    %v931 = vld [vmem:[#allocation8 + $0xd4] sm:$0xff]
    %v932 = vld [vmem:[#allocation8 + $0xdc] sm:$0xf]
    %v933 = vld [vmem:[#allocation8 + $0xe0] sm:$0xff]
    %v934 = vld [vmem:[#allocation8 + $0xe8] sm:$0xff]
    %v935 = vld [vmem:[#allocation8 + $0xf0] sm:$0xff]
    %v936 = vld [vmem:[#allocation8 + $0xf8] sm:$0xf]
    %v937 = vld [vmem:[#allocation8 + $0xfc] sm:$0xff]
    %v938 = vld [vmem:[#allocation8 + $0x104] sm:$0xff]
    %v939 = vld [vmem:[#allocation8 + $0x10c] sm:$0xff]
    %v940 = vld [vmem:[#allocation8 + $0x114] sm:$0xf]
    %v941 = vld [vmem:[#allocation8 + $0x118] sm:$0xff]
    %v942 = vld [vmem:[#allocation8 + $0x120] sm:$0xff]
    %v943 = vld [vmem:[#allocation8 + $0x128] sm:$0xff]
    %v944 = vld [vmem:[#allocation8 + $0x130] sm:$0xf]
    %v945 = vld [vmem:[#allocation8 + $0x134] sm:$0xff]
    %v946 = vld [vmem:[#allocation8 + $0x13c] sm:$0xff]
    %v947 = vld [vmem:[#allocation8 + $0x144] sm:$0xff]
    %v948 = vld [vmem:[#allocation8 + $0x14c] sm:$0xf]
    %v949 = vld [vmem:[#allocation8 + $0x150] sm:$0xff]
    %v950 = vld [vmem:[#allocation8 + $0x158] sm:$0xff]
    %v951 = vld [vmem:[#allocation8 + $0x160] sm:$0xff]
    %v952 = vld [vmem:[#allocation8 + $0x168] sm:$0xf]
    %v953 = vld [vmem:[#allocation8 + $0x16c] sm:$0xff]
    %v954 = vld [vmem:[#allocation8 + $0x174] sm:$0xff]
    %v955 = vld [vmem:[#allocation8 + $0x17c] sm:$0xff]
    %v956 = vld [vmem:[#allocation8 + $0x184] sm:$0xf]
    %v957 = vld [vmem:[#allocation8 + $0x188] sm:$0xff]
    %v958 = vld [vmem:[#allocation8 + $0x190] sm:$0xff]
    %v959 = vld [vmem:[#allocation8 + $0x198] sm:$0xff]
    %v960 = vld [vmem:[#allocation8 + $0x1a0] sm:$0xf]
    %v961 = vld [vmem:[#allocation8 + $0x1a4] sm:$0xff]
    %v962 = vld [vmem:[#allocation8 + $0x1ac] sm:$0xff]
    %v963 = vld [vmem:[#allocation8 + $0x1b4] sm:$0xff]
    %v964 = vld [vmem:[#allocation8 + $0x1bc] sm:$0xf]
    %v965 = vld [vmem:[#allocation8 + $0x1c0] sm:$0xff]
    %v966 = vld [vmem:[#allocation8 + $0x1c8] sm:$0xff]
    %v967 = vld [vmem:[#allocation8 + $0x1d0] sm:$0xff]
    %v968 = vld [vmem:[#allocation8 + $0x1d8] sm:$0xf]
    %v969 = vld [vmem:[#allocation8 + $0x1dc] sm:$0xff]
    %v970 = vld [vmem:[#allocation8 + $0x1e4] sm:$0xff]
    %v971 = vld [vmem:[#allocation8 + $0x1ec] sm:$0xff]
    %v972 = vld [vmem:[#allocation8 + $0x1f4] sm:$0xf]
    %v973 = vld [vmem:[#allocation8 + $0x1f8] sm:$0xff]
    %v974 = vld [vmem:[#allocation8 + $0x200] sm:$0xff]
    %v975 = vld [vmem:[#allocation8 + $0x208] sm:$0xff]
    %v976 = vld [vmem:[#allocation8 + $0x210] sm:$0xf]
    %v977 = vld [vmem:[#allocation8 + $0x214] sm:$0xff]
    %v978 = vld [vmem:[#allocation8 + $0x21c] sm:$0xff]
    %v979 = vld [vmem:[#allocation8 + $0x224] sm:$0xff]
    %v980 = vld [vmem:[#allocation8 + $0x22c] sm:$0xf]
    %v981 = vld [vmem:[#allocation8 + $0x230] sm:$0xff]
    %v982 = vld [vmem:[#allocation8 + $0x238] sm:$0xff]
    %v983 = vld [vmem:[#allocation8 + $0x240] sm:$0xff]
    %v984 = vld [vmem:[#allocation8 + $0x248] sm:$0xf]
    %v985 = vld [vmem:[#allocation8 + $0x24c] sm:$0xff]
    %v986 = vld [vmem:[#allocation8 + $0x254] sm:$0xff]
    %v987 = vld [vmem:[#allocation8 + $0x25c] sm:$0xff]
    %v988 = vld [vmem:[#allocation8 + $0x264] sm:$0xf]
    %v989 = vld [vmem:[#allocation8 + $0x268] sm:$0xff]
    %v990 = vld [vmem:[#allocation8 + $0x270] sm:$0xff]
    %v991 = vld [vmem:[#allocation8 + $0x278] sm:$0xff]
    %v992 = vld [vmem:[#allocation8 + $0x280] sm:$0xf]
    %v993 = vld [vmem:[#allocation8 + $0x284] sm:$0xff]
    %v994 = vld [vmem:[#allocation8 + $0x28c] sm:$0xff]
    %v995 = vld [vmem:[#allocation8 + $0x294] sm:$0xff]
    %v996 = vld [vmem:[#allocation8 + $0x29c] sm:$0xf]
    %v997 = vld [vmem:[#allocation8 + $0x2a0] sm:$0xff]
    %v998 = vld [vmem:[#allocation8 + $0x2a8] sm:$0xff]
    %v999 = vld [vmem:[#allocation8 + $0x2b0] sm:$0xff]
    %v1000 = vld [vmem:[#allocation8 + $0x2b8] sm:$0xf]
    %v1001 = vld [vmem:[#allocation8 + $0x2bc] sm:$0xff]
    %v1002 = vld [vmem:[#allocation8 + $0x2c4] sm:$0xff]
    %v1003 = vld [vmem:[#allocation8 + $0x2cc] sm:$0xff]
    %v1004 = vld [vmem:[#allocation8 + $0x2d4] sm:$0xf]
    %v1005 = vld [vmem:[#allocation8 + $0x2d8] sm:$0xff]
    %v1006 = vld [vmem:[#allocation8 + $0x2e0] sm:$0xff]
    %v1007 = vld [vmem:[#allocation8 + $0x2e8] sm:$0xff]
    %v1008 = vld [vmem:[#allocation8 + $0x2f0] sm:$0xf]
    %v1009 = vld [vmem:[#allocation8 + $0x2f4] sm:$0xff]
    %v1010 = vld [vmem:[#allocation8 + $0x2fc] sm:$0xff]
    %v1011 = vld [vmem:[#allocation8 + $0x304] sm:$0xff]
    %v1012 = vld [vmem:[#allocation8 + $0x30c] sm:$0xf]
    %v1013 = vld [vmem:[#allocation8 + $0x310] sm:$0xff]
    %v1014 = vld [vmem:[#allocation8 + $0x318] sm:$0xff]
    %v1015 = vld [vmem:[#allocation8 + $0x320] sm:$0xff]
    %v1016 = vld [vmem:[#allocation8 + $0x328] sm:$0xf]
    %v1017 = vld [vmem:[#allocation8 + $0x32c] sm:$0xff]
    %v1018 = vld [vmem:[#allocation8 + $0x334] sm:$0xff]
    %v1019 = vld [vmem:[#allocation8 + $0x33c] sm:$0xff]
    %v1020 = vld [vmem:[#allocation8 + $0x344] sm:$0xf]
    %v1021 = vld [vmem:[#allocation8 + $0x348] sm:$0xff]
    %v1022 = vld [vmem:[#allocation8 + $0x350] sm:$0xff]
    %v1023 = vld [vmem:[#allocation8 + $0x358] sm:$0xff]
    %v1024 = vld [vmem:[#allocation8 + $0x360] sm:$0xf]
    %v1025 = vld [vmem:[#allocation8 + $0x364] sm:$0xff]
    %v1026 = vld [vmem:[#allocation8 + $0x36c] sm:$0xff]
    %v1027 = vld [vmem:[#allocation8 + $0x374] sm:$0xff]
    %v1028 = vld [vmem:[#allocation8 + $0x37c] sm:$0xf]
    %v1029 = vld [vmem:[%s6] sm:$0xff]
    %v1031 = vlaneseq
    %v1032 = vshrl.u32 %v1031, 7
    %v1033 = vsub.s32 0, %v1032
    %v1034 = vrot.slane %v1029, %v1033
    %v1035 = vlaneseq
    %v1036 = vshrl.u32 %v1035, 7
    %v1037 = vsub.s32 1, %v1036
    %v1038 = vrot.slane %v1029, %v1037
    %v1039 = vlaneseq
    %v1040 = vshrl.u32 %v1039, 7
    %v1041 = vsub.s32 2, %v1040
    %v1042 = vrot.slane %v1029, %v1041
    %v1043 = vlaneseq
    %v1044 = vshrl.u32 %v1043, 7
    %v1045 = vsub.s32 3, %v1044
    %v1046 = vrot.slane %v1029, %v1045
    %v1047 = vlaneseq
    %v1048 = vshrl.u32 %v1047, 7
    %v1049 = vsub.s32 4, %v1048
    %v1050 = vrot.slane %v1029, %v1049
    %v1051 = vlaneseq
    %v1052 = vshrl.u32 %v1051, 7
    %v1053 = vsub.s32 5, %v1052
    %v1054 = vrot.slane %v1029, %v1053
    %v1055 = vlaneseq
    %v1056 = vshrl.u32 %v1055, 7
    %v1057 = vsub.s32 6, %v1056
    %v1058 = vrot.slane %v1029, %v1057
    %v1194 = vunpack.c.l.b16 %v901
    %v1195 = vunpack.c.h.b16 %v901
    %v1196 = vunpack.c.l.b16 %v902
    %v1197 = vunpack.c.h.b16 %v902
    %v1198 = vunpack.c.l.b16 %v903
    %v1199 = vunpack.c.h.b16 %v903
    %v1200 = vunpack.c.l.b16 %v904
    %v1201 = vunpack.c.l.b16 %v905
    %v1202 = vunpack.c.h.b16 %v905
    %v1203 = vunpack.c.l.b16 %v906
    %v1204 = vunpack.c.h.b16 %v906
    %v1205 = vunpack.c.l.b16 %v907
    %v1206 = vunpack.c.h.b16 %v907
    %v1207 = vunpack.c.l.b16 %v908
    %v1208 = vunpack.c.l.b16 %v909
    %v1209 = vunpack.c.h.b16 %v909
    %v1210 = vunpack.c.l.b16 %v910
    %v1211 = vunpack.c.h.b16 %v910
    %v1212 = vunpack.c.l.b16 %v911
    %v1213 = vunpack.c.h.b16 %v911
    %v1214 = vunpack.c.l.b16 %v912
    %v1215 = vunpack.c.l.b16 %v913
    %v1216 = vunpack.c.h.b16 %v913
    %v1217 = vunpack.c.l.b16 %v914
    %v1218 = vunpack.c.h.b16 %v914
    %v1219 = vunpack.c.l.b16 %v915
    %v1220 = vunpack.c.h.b16 %v915
    %v1221 = vunpack.c.l.b16 %v916
    %v1222 = vunpack.c.l.b16 %v917
    %v1223 = vunpack.c.h.b16 %v917
    %v1224 = vunpack.c.l.b16 %v918
    %v1225 = vunpack.c.h.b16 %v918
    %v1226 = vunpack.c.l.b16 %v919
    %v1227 = vunpack.c.h.b16 %v919
    %v1228 = vunpack.c.l.b16 %v920
    %v1229 = vunpack.c.l.b16 %v921
    %v1230 = vunpack.c.h.b16 %v921
    %v1231 = vunpack.c.l.b16 %v922
    %v1232 = vunpack.c.h.b16 %v922
    %v1233 = vunpack.c.l.b16 %v923
    %v1234 = vunpack.c.h.b16 %v923
    %v1235 = vunpack.c.l.b16 %v924
    %v1236 = vunpack.c.l.b16 %v925
    %v1237 = vunpack.c.h.b16 %v925
    %v1238 = vunpack.c.l.b16 %v926
    %v1239 = vunpack.c.h.b16 %v926
    %v1240 = vunpack.c.l.b16 %v927
    %v1241 = vunpack.c.h.b16 %v927
    %v1242 = vunpack.c.l.b16 %v928
    %v1243 = vunpack.c.l.b16 %v929
    %v1244 = vunpack.c.h.b16 %v929
    %v1245 = vunpack.c.l.b16 %v930
    %v1246 = vunpack.c.h.b16 %v930
    %v1247 = vunpack.c.l.b16 %v931
    %v1248 = vunpack.c.h.b16 %v931
    %v1249 = vunpack.c.l.b16 %v932
    %v1250 = vunpack.c.l.b16 %v933
    %v1251 = vunpack.c.h.b16 %v933
    %v1252 = vunpack.c.l.b16 %v934
    %v1253 = vunpack.c.h.b16 %v934
    %v1254 = vunpack.c.l.b16 %v935
    %v1255 = vunpack.c.h.b16 %v935
    %v1256 = vunpack.c.l.b16 %v936
    %v1257 = vunpack.c.l.b16 %v937
    %v1258 = vunpack.c.h.b16 %v937
    %v1259 = vunpack.c.l.b16 %v938
    %v1260 = vunpack.c.h.b16 %v938
    %v1261 = vunpack.c.l.b16 %v939
    %v1262 = vunpack.c.h.b16 %v939
    %v1263 = vunpack.c.l.b16 %v940
    %v1264 = vunpack.c.l.b16 %v941
    %v1265 = vunpack.c.h.b16 %v941
    %v1266 = vunpack.c.l.b16 %v942
    %v1267 = vunpack.c.h.b16 %v942
    %v1268 = vunpack.c.l.b16 %v943
    %v1269 = vunpack.c.h.b16 %v943
    %v1270 = vunpack.c.l.b16 %v944
    %v1271 = vunpack.c.l.b16 %v945
    %v1272 = vunpack.c.h.b16 %v945
    %v1273 = vunpack.c.l.b16 %v946
    %v1274 = vunpack.c.h.b16 %v946
    %v1275 = vunpack.c.l.b16 %v947
    %v1276 = vunpack.c.h.b16 %v947
    %v1277 = vunpack.c.l.b16 %v948
    %v1278 = vunpack.c.l.b16 %v949
    %v1279 = vunpack.c.h.b16 %v949
    %v1280 = vunpack.c.l.b16 %v950
    %v1281 = vunpack.c.h.b16 %v950
    %v1282 = vunpack.c.l.b16 %v951
    %v1283 = vunpack.c.h.b16 %v951
    %v1284 = vunpack.c.l.b16 %v952
    %v1285 = vunpack.c.l.b16 %v953
    %v1286 = vunpack.c.h.b16 %v953
    %v1287 = vunpack.c.l.b16 %v954
    %v1288 = vunpack.c.h.b16 %v954
    %v1289 = vunpack.c.l.b16 %v955
    %v1290 = vunpack.c.h.b16 %v955
    %v1291 = vunpack.c.l.b16 %v956
    %v1292 = vunpack.c.l.b16 %v957
    %v1293 = vunpack.c.h.b16 %v957
    %v1294 = vunpack.c.l.b16 %v958
    %v1295 = vunpack.c.h.b16 %v958
    %v1296 = vunpack.c.l.b16 %v959
    %v1297 = vunpack.c.h.b16 %v959
    %v1298 = vunpack.c.l.b16 %v960
    %v1299 = vunpack.c.l.b16 %v961
    %v1300 = vunpack.c.h.b16 %v961
    %v1301 = vunpack.c.l.b16 %v962
    %v1302 = vunpack.c.h.b16 %v962
    %v1303 = vunpack.c.l.b16 %v963
    %v1304 = vunpack.c.h.b16 %v963
    %v1305 = vunpack.c.l.b16 %v964
    %v1306 = vunpack.c.l.b16 %v965
    %v1307 = vunpack.c.h.b16 %v965
    %v1308 = vunpack.c.l.b16 %v966
    %v1309 = vunpack.c.h.b16 %v966
    %v1310 = vunpack.c.l.b16 %v967
    %v1311 = vunpack.c.h.b16 %v967
    %v1312 = vunpack.c.l.b16 %v968
    %v1313 = vunpack.c.l.b16 %v969
    %v1314 = vunpack.c.h.b16 %v969
    %v1315 = vunpack.c.l.b16 %v970
    %v1316 = vunpack.c.h.b16 %v970
    %v1317 = vunpack.c.l.b16 %v971
    %v1318 = vunpack.c.h.b16 %v971
    %v1319 = vunpack.c.l.b16 %v972
    %v1320 = vunpack.c.l.b16 %v973
    %v1321 = vunpack.c.h.b16 %v973
    %v1322 = vunpack.c.l.b16 %v974
    %v1323 = vunpack.c.h.b16 %v974
    %v1324 = vunpack.c.l.b16 %v975
    %v1325 = vunpack.c.h.b16 %v975
    %v1326 = vunpack.c.l.b16 %v976
    %v1327 = vunpack.c.l.b16 %v977
    %v1328 = vunpack.c.h.b16 %v977
    %v1329 = vunpack.c.l.b16 %v978
    %v1330 = vunpack.c.h.b16 %v978
    %v1331 = vunpack.c.l.b16 %v979
    %v1332 = vunpack.c.h.b16 %v979
    %v1333 = vunpack.c.l.b16 %v980
    %v1334 = vunpack.c.l.b16 %v981
    %v1335 = vunpack.c.h.b16 %v981
    %v1336 = vunpack.c.l.b16 %v982
    %v1337 = vunpack.c.h.b16 %v982
    %v1338 = vunpack.c.l.b16 %v983
    %v1339 = vunpack.c.h.b16 %v983
    %v1340 = vunpack.c.l.b16 %v984
    %v1341 = vunpack.c.l.b16 %v985
    %v1342 = vunpack.c.h.b16 %v985
    %v1343 = vunpack.c.l.b16 %v986
    %v1344 = vunpack.c.h.b16 %v986
    %v1345 = vunpack.c.l.b16 %v987
    %v1346 = vunpack.c.h.b16 %v987
    %v1347 = vunpack.c.l.b16 %v988
    %v1348 = vunpack.c.l.b16 %v989
    %v1349 = vunpack.c.h.b16 %v989
    %v1350 = vunpack.c.l.b16 %v990
    %v1351 = vunpack.c.h.b16 %v990
    %v1352 = vunpack.c.l.b16 %v991
    %v1353 = vunpack.c.h.b16 %v991
    %v1354 = vunpack.c.l.b16 %v992
    %v1355 = vunpack.c.l.b16 %v993
    %v1356 = vunpack.c.h.b16 %v993
    %v1357 = vunpack.c.l.b16 %v994
    %v1358 = vunpack.c.h.b16 %v994
    %v1359 = vunpack.c.l.b16 %v995
    %v1360 = vunpack.c.h.b16 %v995
    %v1361 = vunpack.c.l.b16 %v996
    %v1362 = vunpack.c.l.b16 %v997
    %v1363 = vunpack.c.h.b16 %v997
    %v1364 = vunpack.c.l.b16 %v998
    %v1365 = vunpack.c.h.b16 %v998
    %v1366 = vunpack.c.l.b16 %v999
    %v1367 = vunpack.c.h.b16 %v999
    %v1368 = vunpack.c.l.b16 %v1000
    %v1369 = vunpack.c.l.b16 %v1001
    %v1370 = vunpack.c.h.b16 %v1001
    %v1371 = vunpack.c.l.b16 %v1002
    %v1372 = vunpack.c.h.b16 %v1002
    %v1373 = vunpack.c.l.b16 %v1003
    %v1374 = vunpack.c.h.b16 %v1003
    %v1375 = vunpack.c.l.b16 %v1004
    %v1376 = vunpack.c.l.b16 %v1005
    %v1377 = vunpack.c.h.b16 %v1005
    %v1378 = vunpack.c.l.b16 %v1006
    %v1379 = vunpack.c.h.b16 %v1006
    %v1380 = vunpack.c.l.b16 %v1007
    %v1381 = vunpack.c.h.b16 %v1007
    %v1382 = vunpack.c.l.b16 %v1008
    %v1383 = vunpack.c.l.b16 %v1009
    %v1384 = vunpack.c.h.b16 %v1009
    %v1385 = vunpack.c.l.b16 %v1010
    %v1386 = vunpack.c.h.b16 %v1010
    %v1387 = vunpack.c.l.b16 %v1011
    %v1388 = vunpack.c.h.b16 %v1011
    %v1389 = vunpack.c.l.b16 %v1012
    %v1390 = vunpack.c.l.b16 %v1013
    %v1391 = vunpack.c.h.b16 %v1013
    %v1392 = vunpack.c.l.b16 %v1014
    %v1393 = vunpack.c.h.b16 %v1014
    %v1394 = vunpack.c.l.b16 %v1015
    %v1395 = vunpack.c.h.b16 %v1015
    %v1396 = vunpack.c.l.b16 %v1016
    %v1397 = vunpack.c.l.b16 %v1017
    %v1398 = vunpack.c.h.b16 %v1017
    %v1399 = vunpack.c.l.b16 %v1018
    %v1400 = vunpack.c.h.b16 %v1018
    %v1401 = vunpack.c.l.b16 %v1019
    %v1402 = vunpack.c.h.b16 %v1019
    %v1403 = vunpack.c.l.b16 %v1020
    %v1404 = vunpack.c.l.b16 %v1021
    %v1405 = vunpack.c.h.b16 %v1021
    %v1406 = vunpack.c.l.b16 %v1022
    %v1407 = vunpack.c.h.b16 %v1022
    %v1408 = vunpack.c.l.b16 %v1023
    %v1409 = vunpack.c.h.b16 %v1023
    %v1410 = vunpack.c.l.b16 %v1024
    %v1411 = vunpack.c.l.b16 %v1025
    %v1412 = vunpack.c.h.b16 %v1025
    %v1413 = vunpack.c.l.b16 %v1026
    %v1414 = vunpack.c.h.b16 %v1026
    %v1415 = vunpack.c.l.b16 %v1027
    %v1416 = vunpack.c.h.b16 %v1027
    %v1417 = vunpack.c.l.b16 %v1028
    %v1418 = vpack.c.b16 %v1201, %v1194
    %v1419 = vpack.c.b16 %v1202, %v1195
    %v1420 = vpack.c.b16 %v1203, %v1196
    %v1421 = vpack.c.b16 %v1204, %v1197
    %v1422 = vpack.c.b16 %v1205, %v1198
    %v1423 = vpack.c.b16 %v1206, %v1199
    %v1424 = vpack.c.b16 %v1207, %v1200
    %v1425 = vpack.c.b16 %v1215, %v1208
    %v1426 = vpack.c.b16 %v1216, %v1209
    %v1427 = vpack.c.b16 %v1217, %v1210
    %v1428 = vpack.c.b16 %v1218, %v1211
    %v1429 = vpack.c.b16 %v1219, %v1212
    %v1430 = vpack.c.b16 %v1220, %v1213
    %v1431 = vpack.c.b16 %v1221, %v1214
    %v1432 = vpack.c.b16 %v1229, %v1222
    %v1433 = vpack.c.b16 %v1230, %v1223
    %v1434 = vpack.c.b16 %v1231, %v1224
    %v1435 = vpack.c.b16 %v1232, %v1225
    %v1436 = vpack.c.b16 %v1233, %v1226
    %v1437 = vpack.c.b16 %v1234, %v1227
    %v1438 = vpack.c.b16 %v1235, %v1228
    %v1439 = vpack.c.b16 %v1243, %v1236
    %v1440 = vpack.c.b16 %v1244, %v1237
    %v1441 = vpack.c.b16 %v1245, %v1238
    %v1442 = vpack.c.b16 %v1246, %v1239
    %v1443 = vpack.c.b16 %v1247, %v1240
    %v1444 = vpack.c.b16 %v1248, %v1241
    %v1445 = vpack.c.b16 %v1249, %v1242
    %v1446 = vpack.c.b16 %v1257, %v1250
    %v1447 = vpack.c.b16 %v1258, %v1251
    %v1448 = vpack.c.b16 %v1259, %v1252
    %v1449 = vpack.c.b16 %v1260, %v1253
    %v1450 = vpack.c.b16 %v1261, %v1254
    %v1451 = vpack.c.b16 %v1262, %v1255
    %v1452 = vpack.c.b16 %v1263, %v1256
    %v1453 = vpack.c.b16 %v1271, %v1264
    %v1454 = vpack.c.b16 %v1272, %v1265
    %v1455 = vpack.c.b16 %v1273, %v1266
    %v1456 = vpack.c.b16 %v1274, %v1267
    %v1457 = vpack.c.b16 %v1275, %v1268
    %v1458 = vpack.c.b16 %v1276, %v1269
    %v1459 = vpack.c.b16 %v1277, %v1270
    %v1460 = vpack.c.b16 %v1285, %v1278
    %v1461 = vpack.c.b16 %v1286, %v1279
    %v1462 = vpack.c.b16 %v1287, %v1280
    %v1463 = vpack.c.b16 %v1288, %v1281
    %v1464 = vpack.c.b16 %v1289, %v1282
    %v1465 = vpack.c.b16 %v1290, %v1283
    %v1466 = vpack.c.b16 %v1291, %v1284
    %v1467 = vpack.c.b16 %v1299, %v1292
    %v1468 = vpack.c.b16 %v1300, %v1293
    %v1469 = vpack.c.b16 %v1301, %v1294
    %v1470 = vpack.c.b16 %v1302, %v1295
    %v1471 = vpack.c.b16 %v1303, %v1296
    %v1472 = vpack.c.b16 %v1304, %v1297
    %v1473 = vpack.c.b16 %v1305, %v1298
    %v1474 = vpack.c.b16 %v1313, %v1306
    %v1475 = vpack.c.b16 %v1314, %v1307
    %v1476 = vpack.c.b16 %v1315, %v1308
    %v1477 = vpack.c.b16 %v1316, %v1309
    %v1478 = vpack.c.b16 %v1317, %v1310
    %v1479 = vpack.c.b16 %v1318, %v1311
    %v1480 = vpack.c.b16 %v1319, %v1312
    %v1481 = vpack.c.b16 %v1327, %v1320
    %v1482 = vpack.c.b16 %v1328, %v1321
    %v1483 = vpack.c.b16 %v1329, %v1322
    %v1484 = vpack.c.b16 %v1330, %v1323
    %v1485 = vpack.c.b16 %v1331, %v1324
    %v1486 = vpack.c.b16 %v1332, %v1325
    %v1487 = vpack.c.b16 %v1333, %v1326
    %v1488 = vpack.c.b16 %v1341, %v1334
    %v1489 = vpack.c.b16 %v1342, %v1335
    %v1490 = vpack.c.b16 %v1343, %v1336
    %v1491 = vpack.c.b16 %v1344, %v1337
    %v1492 = vpack.c.b16 %v1345, %v1338
    %v1493 = vpack.c.b16 %v1346, %v1339
    %v1494 = vpack.c.b16 %v1347, %v1340
    %v1495 = vpack.c.b16 %v1355, %v1348
    %v1496 = vpack.c.b16 %v1356, %v1349
    %v1497 = vpack.c.b16 %v1357, %v1350
    %v1498 = vpack.c.b16 %v1358, %v1351
    %v1499 = vpack.c.b16 %v1359, %v1352
    %v1500 = vpack.c.b16 %v1360, %v1353
    %v1501 = vpack.c.b16 %v1361, %v1354
    %v1502 = vpack.c.b16 %v1369, %v1362
    %v1503 = vpack.c.b16 %v1370, %v1363
    %v1504 = vpack.c.b16 %v1371, %v1364
    %v1505 = vpack.c.b16 %v1372, %v1365
    %v1506 = vpack.c.b16 %v1373, %v1366
    %v1507 = vpack.c.b16 %v1374, %v1367
    %v1508 = vpack.c.b16 %v1375, %v1368
    %v1509 = vpack.c.b16 %v1383, %v1376
    %v1510 = vpack.c.b16 %v1384, %v1377
    %v1511 = vpack.c.b16 %v1385, %v1378
    %v1512 = vpack.c.b16 %v1386, %v1379
    %v1513 = vpack.c.b16 %v1387, %v1380
    %v1514 = vpack.c.b16 %v1388, %v1381
    %v1515 = vpack.c.b16 %v1389, %v1382
    %v1516 = vpack.c.b16 %v1397, %v1390
    %v1517 = vpack.c.b16 %v1398, %v1391
    %v1518 = vpack.c.b16 %v1399, %v1392
    %v1519 = vpack.c.b16 %v1400, %v1393
    %v1520 = vpack.c.b16 %v1401, %v1394
    %v1521 = vpack.c.b16 %v1402, %v1395
    %v1522 = vpack.c.b16 %v1403, %v1396
    %v1523 = vpack.c.b16 %v1411, %v1404
    %v1524 = vpack.c.b16 %v1412, %v1405
    %v1525 = vpack.c.b16 %v1413, %v1406
    %v1526 = vpack.c.b16 %v1414, %v1407
    %v1527 = vpack.c.b16 %v1415, %v1408
    %v1528 = vpack.c.b16 %v1416, %v1409
    %v1529 = vpack.c.b16 %v1417, %v1410
    %1642 = vmatprep.subr.bf16.mxu0 %v1419
    %1643 = vmatpush1.bf16.msra.mxu0 %v1418
    %1644 = vmatprep.subr.bf16.mxu0 %v1426
    %1645 = vmatpush1.bf16.msra.mxu0 %v1425
    %1646 = vmatprep.subr.bf16.mxu0 %v1433
    %1647 = vmatpush1.bf16.msra.mxu0 %v1432
    %1648 = vmatprep.subr.bf16.mxu0 %v1440
    %1649 = vmatpush1.bf16.msra.mxu0 %v1439
    %1650 = vmatprep.subr.bf16.mxu0 %v1447
    %1651 = vmatpush1.bf16.msra.mxu0 %v1446
    %1652 = vmatprep.subr.bf16.mxu0 %v1454
    %1653 = vmatpush1.bf16.msra.mxu0 %v1453
    %1654 = vmatprep.subr.bf16.mxu0 %v1461
    %1655 = vmatpush1.bf16.msra.mxu0 %v1460
    %1656 = vmatprep.subr.bf16.mxu0 %v1468
    %1657 = vmatpush1.bf16.msra.mxu0 %v1467
    %1658 = vmatprep.subr.bf16.mxu0 %v1475
    %1659 = vmatpush1.bf16.msra.mxu0 %v1474
    %1660 = vmatprep.subr.bf16.mxu0 %v1482
    %1661 = vmatpush1.bf16.msra.mxu0 %v1481
    %1662 = vmatprep.subr.bf16.mxu0 %v1489
    %1663 = vmatpush1.bf16.msra.mxu0 %v1488
    %1664 = vmatprep.subr.bf16.mxu0 %v1496
    %1665 = vmatpush1.bf16.msra.mxu0 %v1495
    %1666 = vmatprep.subr.bf16.mxu0 %v1503
    %1667 = vmatpush1.bf16.msra.mxu0 %v1502
    %1668 = vmatprep.subr.bf16.mxu0 %v1510
    %1669 = vmatpush1.bf16.msra.mxu0 %v1509
    %1670 = vmatprep.subr.bf16.mxu0 %v1517
    %1671 = vmatpush1.bf16.msra.mxu0 %v1516
    %1672 = vmatprep.subr.bf16.mxu0 %v1524
    %1673 = vmatpush1.bf16.msra.mxu0 %v1523
    %1674 = vmatprep.mubr.bf16.mxu0 %v886
    %1675 = vmatmul.mubr.bf16.gmra.mrb[0].mxu0 %v885
    %v1676 = vpop.f32.mrb[0].mxu0
    %v1677 = vadd.f32 %v1034, %v1676
    %v1678 = vpop.f32.mrb[0].mxu0
    %v1679 = vadd.f32 %v1038, %v1678
    %v1680 = vpop.f32.mrb[0].mxu0
    %v1681 = vadd.f32 %v1034, %v1680
    %v1682 = vpop.f32.mrb[0].mxu0
    %v1683 = vadd.f32 %v1038, %v1682
    %1684 = vmatprep.mubr.bf16.mxu0 %v888
    %1685 = vmatmul.mubr.bf16.gmra.mrb[0].mxu0 %v887
    %v1686 = vpop.f32.mrb[0].mxu0
    %v1687 = vadd.f32 %v1034, %v1686
    %v1688 = vpop.f32.mrb[0].mxu0
    %v1689 = vadd.f32 %v1038, %v1688
    %v1690 = vpop.f32.mrb[0].mxu0
    %v1691 = vadd.f32 %v1034, %v1690
    %v1692 = vpop.f32.mrb[0].mxu0
    %v1693 = vadd.f32 %v1038, %v1692
    %1694 = vmatprep.mubr.bf16.mxu0 %v890
    %1695 = vmatmul.mubr.bf16.gmra.mrb[0].mxu0 %v889
    %v1696 = vpop.f32.mrb[0].mxu0
    %v1697 = vadd.f32 %v1034, %v1696
    %v1698 = vpop.f32.mrb[0].mxu0
    %v1699 = vadd.f32 %v1038, %v1698
    %v1700 = vpop.f32.mrb[0].mxu0
    %v1701 = vadd.f32 %v1034, %v1700
    %v1702 = vpop.f32.mrb[0].mxu0
    %v1703 = vadd.f32 %v1038, %v1702
    %1704 = vmatprep.mubr.bf16.mxu0 %v892
    %1705 = vmatmul.mubr.bf16.gmra.mrb[0].mxu0 %v891
    %v1706 = vpop.f32.mrb[0].mxu0
    %v1707 = vadd.f32 %v1034, %v1706
    %v1708 = vpop.f32.mrb[0].mxu0
    %v1709 = vadd.f32 %v1038, %v1708
    %v1710 = vpop.f32.mrb[0].mxu0
    %v1711 = vadd.f32 %v1034, %v1710
    %v1712 = vpop.f32.mrb[0].mxu0
    %v1713 = vadd.f32 %v1038, %v1712
    %1714 = vmatprep.mubr.bf16.mxu0 %v894
    %1715 = vmatmul.mubr.bf16.gmra.mrb[0].mxu0 %v893
    %v1716 = vpop.f32.mrb[0].mxu0
    %v1717 = vadd.f32 %v1034, %v1716
    %v1718 = vpop.f32.mrb[0].mxu0
    %v1719 = vadd.f32 %v1038, %v1718
    %v1720 = vpop.f32.mrb[0].mxu0
    %v1721 = vadd.f32 %v1034, %v1720
    %v1722 = vpop.f32.mrb[0].mxu0
    %v1723 = vadd.f32 %v1038, %v1722
    %1724 = vmatprep.mubr.bf16.mxu0 %v896
    %1725 = vmatmul.mubr.bf16.gmra.mrb[0].mxu0 %v895
    %v1726 = vpop.f32.mrb[0].mxu0
    %v1727 = vadd.f32 %v1034, %v1726
    %v1728 = vpop.f32.mrb[0].mxu0
    %v1729 = vadd.f32 %v1038, %v1728
    %v1730 = vpop.f32.mrb[0].mxu0
    %v1731 = vadd.f32 %v1034, %v1730
    %v1732 = vpop.f32.mrb[0].mxu0
    %v1733 = vadd.f32 %v1038, %v1732
    %1734 = vmatprep.mubr.bf16.mxu0 %v898
    %1735 = vmatmul.mubr.bf16.gmra.mrb[0].mxu0 %v897
    %v1736 = vpop.f32.mrb[0].mxu0
    %v1737 = vadd.f32 %v1034, %v1736
    %v1738 = vpop.f32.mrb[0].mxu0
    %v1739 = vadd.f32 %v1038, %v1738
    %v1740 = vpop.f32.mrb[0].mxu0
    %v1741 = vadd.f32 %v1034, %v1740
    %v1742 = vpop.f32.mrb[0].mxu0
    %v1743 = vadd.f32 %v1038, %v1742
    %1744 = vmatprep.mubr.bf16.mxu0 %v900
    %1745 = vmatmul.mubr.bf16.gmra.mrb[0].mxu0 %v899
    %v1746 = vpop.f32.mrb[0].mxu0
    %v1747 = vadd.f32 %v1034, %v1746
    %v1748 = vpop.f32.mrb[0].mxu0
    %v1749 = vadd.f32 %v1038, %v1748
    %v1750 = vpop.f32.mrb[0].mxu0
    %v1751 = vadd.f32 %v1034, %v1750
    %v1752 = vpop.f32.mrb[0].mxu0
    %v1753 = vadd.f32 %v1038, %v1752
    %1754 = vdwg.mxu0
    %1755 = vmatprep.subr.bf16.mxu0 %v1421
    %1756 = vmatpush1.bf16.msra.mxu0 %v1420
    %1757 = vmatprep.subr.bf16.mxu0 %v1428
    %1758 = vmatpush1.bf16.msra.mxu0 %v1427
    %1759 = vmatprep.subr.bf16.mxu0 %v1435
    %1760 = vmatpush1.bf16.msra.mxu0 %v1434
    %1761 = vmatprep.subr.bf16.mxu0 %v1442
    %1762 = vmatpush1.bf16.msra.mxu0 %v1441
    %1763 = vmatprep.subr.bf16.mxu0 %v1449
    %1764 = vmatpush1.bf16.msra.mxu0 %v1448
    %1765 = vmatprep.subr.bf16.mxu0 %v1456
    %1766 = vmatpush1.bf16.msra.mxu0 %v1455
    %1767 = vmatprep.subr.bf16.mxu0 %v1463
    %1768 = vmatpush1.bf16.msra.mxu0 %v1462
    %1769 = vmatprep.subr.bf16.mxu0 %v1470
    %1770 = vmatpush1.bf16.msra.mxu0 %v1469
    %1771 = vmatprep.subr.bf16.mxu0 %v1477
    %1772 = vmatpush1.bf16.msra.mxu0 %v1476
    %1773 = vmatprep.subr.bf16.mxu0 %v1484
    %1774 = vmatpush1.bf16.msra.mxu0 %v1483
    %1775 = vmatprep.subr.bf16.mxu0 %v1491
    %1776 = vmatpush1.bf16.msra.mxu0 %v1490
    %1777 = vmatprep.subr.bf16.mxu0 %v1498
    %1778 = vmatpush1.bf16.msra.mxu0 %v1497
    %1779 = vmatprep.subr.bf16.mxu0 %v1505
    %1780 = vmatpush1.bf16.msra.mxu0 %v1504
    %1781 = vmatprep.subr.bf16.mxu0 %v1512
    %1782 = vmatpush1.bf16.msra.mxu0 %v1511
    %1783 = vmatprep.subr.bf16.mxu0 %v1519
    %1784 = vmatpush1.bf16.msra.mxu0 %v1518
    %1785 = vmatprep.subr.bf16.mxu0 %v1526
    %1786 = vmatpush1.bf16.msra.mxu0 %v1525
    %1787 = vmatprep.mubr.bf16.mxu0 %v886
    %1788 = vmatmul.mubr.bf16.gmra.mrb[0].mxu0 %v885
    %v1789 = vpop.f32.mrb[0].mxu0
    %v1790 = vadd.f32 %v1042, %v1789
    %v1791 = vpop.f32.mrb[0].mxu0
    %v1792 = vadd.f32 %v1046, %v1791
    %v1793 = vpop.f32.mrb[0].mxu0
    %v1794 = vadd.f32 %v1042, %v1793
    %v1795 = vpop.f32.mrb[0].mxu0
    %v1796 = vadd.f32 %v1046, %v1795
    %1797 = vmatprep.mubr.bf16.mxu0 %v888
    %1798 = vmatmul.mubr.bf16.gmra.mrb[0].mxu0 %v887
    %v1799 = vpop.f32.mrb[0].mxu0
    %v1800 = vadd.f32 %v1042, %v1799
    %v1801 = vpop.f32.mrb[0].mxu0
    %v1802 = vadd.f32 %v1046, %v1801
    %v1803 = vpop.f32.mrb[0].mxu0
    %v1804 = vadd.f32 %v1042, %v1803
    %v1805 = vpop.f32.mrb[0].mxu0
    %v1806 = vadd.f32 %v1046, %v1805
    %1807 = vmatprep.mubr.bf16.mxu0 %v890
    %1808 = vmatmul.mubr.bf16.gmra.mrb[0].mxu0 %v889
    %v1809 = vpop.f32.mrb[0].mxu0
    %v1810 = vadd.f32 %v1042, %v1809
    %v1811 = vpop.f32.mrb[0].mxu0
    %v1812 = vadd.f32 %v1046, %v1811
    %v1813 = vpop.f32.mrb[0].mxu0
    %v1814 = vadd.f32 %v1042, %v1813
    %v1815 = vpop.f32.mrb[0].mxu0
    %v1816 = vadd.f32 %v1046, %v1815
    %1817 = vmatprep.mubr.bf16.mxu0 %v892
    %1818 = vmatmul.mubr.bf16.gmra.mrb[0].mxu0 %v891
    %v1819 = vpop.f32.mrb[0].mxu0
    %v1820 = vadd.f32 %v1042, %v1819
    %v1821 = vpop.f32.mrb[0].mxu0
    %v1822 = vadd.f32 %v1046, %v1821
    %v1823 = vpop.f32.mrb[0].mxu0
    %v1824 = vadd.f32 %v1042, %v1823
    %v1825 = vpop.f32.mrb[0].mxu0
    %v1826 = vadd.f32 %v1046, %v1825
    %1827 = vmatprep.mubr.bf16.mxu0 %v894
    %1828 = vmatmul.mubr.bf16.gmra.mrb[0].mxu0 %v893
    %v1829 = vpop.f32.mrb[0].mxu0
    %v1830 = vadd.f32 %v1042, %v1829
    %v1831 = vpop.f32.mrb[0].mxu0
    %v1832 = vadd.f32 %v1046, %v1831
    %v1833 = vpop.f32.mrb[0].mxu0
    %v1834 = vadd.f32 %v1042, %v1833
    %v1835 = vpop.f32.mrb[0].mxu0
    %v1836 = vadd.f32 %v1046, %v1835
    %1837 = vmatprep.mubr.bf16.mxu0 %v896
    %1838 = vmatmul.mubr.bf16.gmra.mrb[0].mxu0 %v895
    %v1839 = vpop.f32.mrb[0].mxu0
    %v1840 = vadd.f32 %v1042, %v1839
    %v1841 = vpop.f32.mrb[0].mxu0
    %v1842 = vadd.f32 %v1046, %v1841
    %v1843 = vpop.f32.mrb[0].mxu0
    %v1844 = vadd.f32 %v1042, %v1843
    %v1845 = vpop.f32.mrb[0].mxu0
    %v1846 = vadd.f32 %v1046, %v1845
    %1847 = vmatprep.mubr.bf16.mxu0 %v898
    %1848 = vmatmul.mubr.bf16.gmra.mrb[0].mxu0 %v897
    %v1849 = vpop.f32.mrb[0].mxu0
    %v1850 = vadd.f32 %v1042, %v1849
    %v1851 = vpop.f32.mrb[0].mxu0
    %v1852 = vadd.f32 %v1046, %v1851
    %v1853 = vpop.f32.mrb[0].mxu0
    %v1854 = vadd.f32 %v1042, %v1853
    %v1855 = vpop.f32.mrb[0].mxu0
    %v1856 = vadd.f32 %v1046, %v1855
    %1857 = vmatprep.mubr.bf16.mxu0 %v900
    %1858 = vmatmul.mubr.bf16.gmra.mrb[0].mxu0 %v899
    %v1859 = vpop.f32.mrb[0].mxu0
    %v1860 = vadd.f32 %v1042, %v1859
    %v1861 = vpop.f32.mrb[0].mxu0
    %v1862 = vadd.f32 %v1046, %v1861
    %v1863 = vpop.f32.mrb[0].mxu0
    %v1864 = vadd.f32 %v1042, %v1863
    %v1865 = vpop.f32.mrb[0].mxu0
    %v1866 = vadd.f32 %v1046, %v1865
    %1867 = vdwg.mxu0
    %1868 = vmatprep.subr.bf16.mxu0 %v1423
    %1869 = vmatpush1.bf16.msra.mxu0 %v1422
    %1870 = vmatprep.subr.bf16.mxu0 %v1430
    %1871 = vmatpush1.bf16.msra.mxu0 %v1429
    %1872 = vmatprep.subr.bf16.mxu0 %v1437
    %1873 = vmatpush1.bf16.msra.mxu0 %v1436
    %1874 = vmatprep.subr.bf16.mxu0 %v1444
    %1875 = vmatpush1.bf16.msra.mxu0 %v1443
    %1876 = vmatprep.subr.bf16.mxu0 %v1451
    %1877 = vmatpush1.bf16.msra.mxu0 %v1450
    %1878 = vmatprep.subr.bf16.mxu0 %v1458
    %1879 = vmatpush1.bf16.msra.mxu0 %v1457
    %1880 = vmatprep.subr.bf16.mxu0 %v1465
    %1881 = vmatpush1.bf16.msra.mxu0 %v1464
    %1882 = vmatprep.subr.bf16.mxu0 %v1472
    %1883 = vmatpush1.bf16.msra.mxu0 %v1471
    %1884 = vmatprep.subr.bf16.mxu0 %v1479
    %1885 = vmatpush1.bf16.msra.mxu0 %v1478
    %1886 = vmatprep.subr.bf16.mxu0 %v1486
    %1887 = vmatpush1.bf16.msra.mxu0 %v1485
    %1888 = vmatprep.subr.bf16.mxu0 %v1493
    %1889 = vmatpush1.bf16.msra.mxu0 %v1492
    %1890 = vmatprep.subr.bf16.mxu0 %v1500
    %1891 = vmatpush1.bf16.msra.mxu0 %v1499
    %1892 = vmatprep.subr.bf16.mxu0 %v1507
    %1893 = vmatpush1.bf16.msra.mxu0 %v1506
    %1894 = vmatprep.subr.bf16.mxu0 %v1514
    %1895 = vmatpush1.bf16.msra.mxu0 %v1513
    %1896 = vmatprep.subr.bf16.mxu0 %v1521
    %1897 = vmatpush1.bf16.msra.mxu0 %v1520
    %1898 = vmatprep.subr.bf16.mxu0 %v1528
    %1899 = vmatpush1.bf16.msra.mxu0 %v1527
    %1900 = vmatprep.mubr.bf16.mxu0 %v886
    %1901 = vmatmul.mubr.bf16.gmra.mrb[0].mxu0 %v885
    %v1902 = vpop.f32.mrb[0].mxu0
    %v1903 = vadd.f32 %v1050, %v1902
    %v1904 = vpop.f32.mrb[0].mxu0
    %v1905 = vadd.f32 %v1054, %v1904
    %v1906 = vpop.f32.mrb[0].mxu0
    %v1907 = vadd.f32 %v1050, %v1906
    %v1908 = vpop.f32.mrb[0].mxu0
    %v1909 = vadd.f32 %v1054, %v1908
    %1910 = vmatprep.mubr.bf16.mxu0 %v888
    %1911 = vmatmul.mubr.bf16.gmra.mrb[0].mxu0 %v887
    %v1912 = vpop.f32.mrb[0].mxu0
    %v1913 = vadd.f32 %v1050, %v1912
    %v1914 = vpop.f32.mrb[0].mxu0
    %v1915 = vadd.f32 %v1054, %v1914
    %v1916 = vpop.f32.mrb[0].mxu0
    %v1917 = vadd.f32 %v1050, %v1916
    %v1918 = vpop.f32.mrb[0].mxu0
    %v1919 = vadd.f32 %v1054, %v1918
    %1920 = vmatprep.mubr.bf16.mxu0 %v890
    %1921 = vmatmul.mubr.bf16.gmra.mrb[0].mxu0 %v889
    %v1922 = vpop.f32.mrb[0].mxu0
    %v1923 = vadd.f32 %v1050, %v1922
    %v1924 = vpop.f32.mrb[0].mxu0
    %v1925 = vadd.f32 %v1054, %v1924
    %v1926 = vpop.f32.mrb[0].mxu0
    %v1927 = vadd.f32 %v1050, %v1926
    %v1928 = vpop.f32.mrb[0].mxu0
    %v1929 = vadd.f32 %v1054, %v1928
    %1930 = vmatprep.mubr.bf16.mxu0 %v892
    %1931 = vmatmul.mubr.bf16.gmra.mrb[0].mxu0 %v891
    %v1932 = vpop.f32.mrb[0].mxu0
    %v1933 = vadd.f32 %v1050, %v1932
    %v1934 = vpop.f32.mrb[0].mxu0
    %v1935 = vadd.f32 %v1054, %v1934
    %v1936 = vpop.f32.mrb[0].mxu0
    %v1937 = vadd.f32 %v1050, %v1936
    %v1938 = vpop.f32.mrb[0].mxu0
    %v1939 = vadd.f32 %v1054, %v1938
    %1940 = vmatprep.mubr.bf16.mxu0 %v894
    %1941 = vmatmul.mubr.bf16.gmra.mrb[0].mxu0 %v893
    %v1942 = vpop.f32.mrb[0].mxu0
    %v1943 = vadd.f32 %v1050, %v1942
    %v1944 = vpop.f32.mrb[0].mxu0
    %v1945 = vadd.f32 %v1054, %v1944
    %v1946 = vpop.f32.mrb[0].mxu0
    %v1947 = vadd.f32 %v1050, %v1946
    %v1948 = vpop.f32.mrb[0].mxu0
    %v1949 = vadd.f32 %v1054, %v1948
    %1950 = vmatprep.mubr.bf16.mxu0 %v896
    %1951 = vmatmul.mubr.bf16.gmra.mrb[0].mxu0 %v895
    %v1952 = vpop.f32.mrb[0].mxu0
    %v1953 = vadd.f32 %v1050, %v1952
    %v1954 = vpop.f32.mrb[0].mxu0
    %v1955 = vadd.f32 %v1054, %v1954
    %v1956 = vpop.f32.mrb[0].mxu0
    %v1957 = vadd.f32 %v1050, %v1956
    %v1958 = vpop.f32.mrb[0].mxu0
    %v1959 = vadd.f32 %v1054, %v1958
    %1960 = vmatprep.mubr.bf16.mxu0 %v898
    %1961 = vmatmul.mubr.bf16.gmra.mrb[0].mxu0 %v897
    %v1962 = vpop.f32.mrb[0].mxu0
    %v1963 = vadd.f32 %v1050, %v1962
    %v1964 = vpop.f32.mrb[0].mxu0
    %v1965 = vadd.f32 %v1054, %v1964
    %v1966 = vpop.f32.mrb[0].mxu0
    %v1967 = vadd.f32 %v1050, %v1966
    %v1968 = vpop.f32.mrb[0].mxu0
    %v1969 = vadd.f32 %v1054, %v1968
    %1970 = vmatprep.mubr.bf16.mxu0 %v900
    %1971 = vmatmul.mubr.bf16.gmra.mrb[0].mxu0 %v899
    %v1972 = vpop.f32.mrb[0].mxu0
    %v1973 = vadd.f32 %v1050, %v1972
    %v1974 = vpop.f32.mrb[0].mxu0
    %v1975 = vadd.f32 %v1054, %v1974
    %v1976 = vpop.f32.mrb[0].mxu0
    %v1977 = vadd.f32 %v1050, %v1976
    %v1978 = vpop.f32.mrb[0].mxu0
    %v1979 = vadd.f32 %v1054, %v1978
    %1980 = vdwg.mxu0
    %1981 = vmatprep.subr.bf16.mxu0 0
    %1982 = vmatpush1.bf16.msra.mxu0 %v1424
    %1983 = vmatprep.subr.bf16.mxu0 0
    %1984 = vmatpush1.bf16.msra.mxu0 %v1431
    %1985 = vmatprep.subr.bf16.mxu0 0
    %1986 = vmatpush1.bf16.msra.mxu0 %v1438
    %1987 = vmatprep.subr.bf16.mxu0 0
    %1988 = vmatpush1.bf16.msra.mxu0 %v1445
    %1989 = vmatprep.subr.bf16.mxu0 0
    %1990 = vmatpush1.bf16.msra.mxu0 %v1452
    %1991 = vmatprep.subr.bf16.mxu0 0
    %1992 = vmatpush1.bf16.msra.mxu0 %v1459
    %1993 = vmatprep.subr.bf16.mxu0 0
    %1994 = vmatpush1.bf16.msra.mxu0 %v1466
    %1995 = vmatprep.subr.bf16.mxu0 0
    %1996 = vmatpush1.bf16.msra.mxu0 %v1473
    %1997 = vmatprep.subr.bf16.mxu0 0
    %1998 = vmatpush1.bf16.msra.mxu0 %v1480
    %1999 = vmatprep.subr.bf16.mxu0 0
    %2000 = vmatpush1.bf16.msra.mxu0 %v1487
    %2001 = vmatprep.subr.bf16.mxu0 0
    %2002 = vmatpush1.bf16.msra.mxu0 %v1494
    %2003 = vmatprep.subr.bf16.mxu0 0
    %2004 = vmatpush1.bf16.msra.mxu0 %v1501
    %2005 = vmatprep.subr.bf16.mxu0 0
    %2006 = vmatpush1.bf16.msra.mxu0 %v1508
    %2007 = vmatprep.subr.bf16.mxu0 0
    %2008 = vmatpush1.bf16.msra.mxu0 %v1515
    %2009 = vmatprep.subr.bf16.mxu0 0
    %2010 = vmatpush1.bf16.msra.mxu0 %v1522
    %2011 = vmatprep.subr.bf16.mxu0 0
    %2012 = vmatpush1.bf16.msra.mxu0 %v1529
    %2013 = vmatprep.mubr.bf16.mxu0 %v886
    %2014 = vmatmul.mubr.bf16.gmra.mrb[0].mxu0 %v885
    %v2015 = vpop.f32.mrb[0].mxu0
    %v2016 = vadd.f32 %v1058, %v2015
    %v2017 = vpop.f32.mrb[0].mxu0
    %v2018 = vpop.f32.mrb[0].mxu0
    %v2019 = vadd.f32 %v1058, %v2018
    %v2020 = vpop.f32.mrb[0].mxu0
    %2021 = vmatprep.mubr.bf16.mxu0 %v888
    %2022 = vmatmul.mubr.bf16.gmra.mrb[0].mxu0 %v887
    %v2023 = vpop.f32.mrb[0].mxu0
    %v2024 = vadd.f32 %v1058, %v2023
    %v2025 = vpop.f32.mrb[0].mxu0
    %v2026 = vpop.f32.mrb[0].mxu0
    %v2027 = vadd.f32 %v1058, %v2026
    %v2028 = vpop.f32.mrb[0].mxu0
    %2029 = vmatprep.mubr.bf16.mxu0 %v890
    %2030 = vmatmul.mubr.bf16.gmra.mrb[0].mxu0 %v889
    %v2031 = vpop.f32.mrb[0].mxu0
    %v2032 = vadd.f32 %v1058, %v2031
    %v2033 = vpop.f32.mrb[0].mxu0
    %v2034 = vpop.f32.mrb[0].mxu0
    %v2035 = vadd.f32 %v1058, %v2034
    %v2036 = vpop.f32.mrb[0].mxu0
    %2037 = vmatprep.mubr.bf16.mxu0 %v892
    %2038 = vmatmul.mubr.bf16.gmra.mrb[0].mxu0 %v891
    %v2039 = vpop.f32.mrb[0].mxu0
    %v2040 = vadd.f32 %v1058, %v2039
    %v2041 = vpop.f32.mrb[0].mxu0
    %v2042 = vpop.f32.mrb[0].mxu0
    %v2043 = vadd.f32 %v1058, %v2042
    %v2044 = vpop.f32.mrb[0].mxu0
    %2045 = vmatprep.mubr.bf16.mxu0 %v894
    %2046 = vmatmul.mubr.bf16.gmra.mrb[0].mxu0 %v893
    %v2047 = vpop.f32.mrb[0].mxu0
    %v2048 = vadd.f32 %v1058, %v2047
    %v2049 = vpop.f32.mrb[0].mxu0
    %v2050 = vpop.f32.mrb[0].mxu0
    %v2051 = vadd.f32 %v1058, %v2050
    %v2052 = vpop.f32.mrb[0].mxu0
    %2053 = vmatprep.mubr.bf16.mxu0 %v896
    %2054 = vmatmul.mubr.bf16.gmra.mrb[0].mxu0 %v895
    %v2055 = vpop.f32.mrb[0].mxu0
    %v2056 = vadd.f32 %v1058, %v2055
    %v2057 = vpop.f32.mrb[0].mxu0
    %v2058 = vpop.f32.mrb[0].mxu0
    %v2059 = vadd.f32 %v1058, %v2058
    %v2060 = vpop.f32.mrb[0].mxu0
    %2061 = vmatprep.mubr.bf16.mxu0 %v898
    %2062 = vmatmul.mubr.bf16.gmra.mrb[0].mxu0 %v897
    %v2063 = vpop.f32.mrb[0].mxu0
    %v2064 = vadd.f32 %v1058, %v2063
    %v2065 = vpop.f32.mrb[0].mxu0
    %v2066 = vpop.f32.mrb[0].mxu0
    %v2067 = vadd.f32 %v1058, %v2066
    %v2068 = vpop.f32.mrb[0].mxu0
    %2069 = vmatprep.mubr.bf16.mxu0 %v900
    %2070 = vmatmul.mubr.bf16.gmra.mrb[0].mxu0 %v899
    %v2071 = vpop.f32.mrb[0].mxu0
    %v2072 = vadd.f32 %v1058, %v2071
    %v2073 = vpop.f32.mrb[0].mxu0
    %v2074 = vpop.f32.mrb[0].mxu0
    %v2075 = vadd.f32 %v1058, %v2074
    %v2076 = vpop.f32.mrb[0].mxu0
    %2077 = vdwg.mxu0
    %v2078 = vtanh.pop %v1677
    %v2079 = vtanh.pop %v1679
    %v2080 = vtanh.pop %v1790
    %v2081 = vtanh.pop %v1792
    %v2082 = vtanh.pop %v1903
    %v2083 = vtanh.pop %v1905
    %v2084 = vtanh.pop %v2016
    %v2085 = vtanh.pop %v1681
    %v2086 = vtanh.pop %v1683
    %v2087 = vtanh.pop %v1794
    %v2088 = vtanh.pop %v1796
    %v2089 = vtanh.pop %v1907
    %v2090 = vtanh.pop %v1909
    %v2091 = vtanh.pop %v2019
    %v2092 = vtanh.pop %v1687
    %v2093 = vtanh.pop %v1689
    %v2094 = vtanh.pop %v1800
    %v2095 = vtanh.pop %v1802
    %v2096 = vtanh.pop %v1913
    %v2097 = vtanh.pop %v1915
    %v2098 = vtanh.pop %v2024
    %v2099 = vtanh.pop %v1691
    %v2100 = vtanh.pop %v1693
    %v2101 = vtanh.pop %v1804
    %v2102 = vtanh.pop %v1806
    %v2103 = vtanh.pop %v1917
    %v2104 = vtanh.pop %v1919
    %v2105 = vtanh.pop %v2027
    %v2106 = vtanh.pop %v1697
    %v2107 = vtanh.pop %v1699
    %v2108 = vtanh.pop %v1810
    %v2109 = vtanh.pop %v1812
    %v2110 = vtanh.pop %v1923
    %v2111 = vtanh.pop %v1925
    %v2112 = vtanh.pop %v2032
    %v2113 = vtanh.pop %v1701
    %v2114 = vtanh.pop %v1703
    %v2115 = vtanh.pop %v1814
    %v2116 = vtanh.pop %v1816
    %v2117 = vtanh.pop %v1927
    %v2118 = vtanh.pop %v1929
    %v2119 = vtanh.pop %v2035
    %v2120 = vtanh.pop %v1707
    %v2121 = vtanh.pop %v1709
    %v2122 = vtanh.pop %v1820
    %v2123 = vtanh.pop %v1822
    %v2124 = vtanh.pop %v1933
    %v2125 = vtanh.pop %v1935
    %v2126 = vtanh.pop %v2040
    %v2127 = vtanh.pop %v1711
    %v2128 = vtanh.pop %v1713
    %v2129 = vtanh.pop %v1824
    %v2130 = vtanh.pop %v1826
    %v2131 = vtanh.pop %v1937
    %v2132 = vtanh.pop %v1939
    %v2133 = vtanh.pop %v2043
    %v2134 = vtanh.pop %v1717
    %v2135 = vtanh.pop %v1719
    %v2136 = vtanh.pop %v1830
    %v2137 = vtanh.pop %v1832
    %v2138 = vtanh.pop %v1943
    %v2139 = vtanh.pop %v1945
    %v2140 = vtanh.pop %v2048
    %v2141 = vtanh.pop %v1721
    %v2142 = vtanh.pop %v1723
    %v2143 = vtanh.pop %v1834
    %v2144 = vtanh.pop %v1836
    %v2145 = vtanh.pop %v1947
    %v2146 = vtanh.pop %v1949
    %v2147 = vtanh.pop %v2051
    %v2148 = vtanh.pop %v1727
    %v2149 = vtanh.pop %v1729
    %v2150 = vtanh.pop %v1840
    %v2151 = vtanh.pop %v1842
    %v2152 = vtanh.pop %v1953
    %v2153 = vtanh.pop %v1955
    %v2154 = vtanh.pop %v2056
    %v2155 = vtanh.pop %v1731
    %v2156 = vtanh.pop %v1733
    %v2157 = vtanh.pop %v1844
    %v2158 = vtanh.pop %v1846
    %v2159 = vtanh.pop %v1957
    %v2160 = vtanh.pop %v1959
    %v2161 = vtanh.pop %v2059
    %v2162 = vtanh.pop %v1737
    %v2163 = vtanh.pop %v1739
    %v2164 = vtanh.pop %v1850
    %v2165 = vtanh.pop %v1852
    %v2166 = vtanh.pop %v1963
    %v2167 = vtanh.pop %v1965
    %v2168 = vtanh.pop %v2064
    %v2169 = vtanh.pop %v1741
    %v2170 = vtanh.pop %v1743
    %v2171 = vtanh.pop %v1854
    %v2172 = vtanh.pop %v1856
    %v2173 = vtanh.pop %v1967
    %v2174 = vtanh.pop %v1969
    %v2175 = vtanh.pop %v2067
    %v2176 = vtanh.pop %v1747
    %v2177 = vtanh.pop %v1749
    %v2178 = vtanh.pop %v1860
    %v2179 = vtanh.pop %v1862
    %v2180 = vtanh.pop %v1973
    %v2181 = vtanh.pop %v1975
    %v2182 = vtanh.pop %v2072
    %v2183 = vtanh.pop %v1751
    %v2184 = vtanh.pop %v1753
    %v2185 = vtanh.pop %v1864
    %v2186 = vtanh.pop %v1866
    %v2187 = vtanh.pop %v1977
    %v2188 = vtanh.pop %v1979
    %v2189 = vtanh.pop %v2075
    %2190 = vst [vmem:[#allocation10] sm:$0xff] %v2078
    %2191 = vst [vmem:[#allocation10 + $0x8] sm:$0xff] %v2079
    %2192 = vst [vmem:[#allocation10 + $0x10] sm:$0xff] %v2080
    %2193 = vst [vmem:[#allocation10 + $0x18] sm:$0xff] %v2081
    %2194 = vst [vmem:[#allocation10 + $0x20] sm:$0xff] %v2082
    %2195 = vst [vmem:[#allocation10 + $0x28] sm:$0xff] %v2083
    %2196 = vst [vmem:[#allocation10 + $0x30] sm:$0xff] %v2084
    %2197 = vst [vmem:[#allocation10 + $0x38] sm:$0xff] %v2085
    %2198 = vst [vmem:[#allocation10 + $0x40] sm:$0xff] %v2086
    %2199 = vst [vmem:[#allocation10 + $0x48] sm:$0xff] %v2087
    %2200 = vst [vmem:[#allocation10 + $0x50] sm:$0xff] %v2088
    %2201 = vst [vmem:[#allocation10 + $0x58] sm:$0xff] %v2089
    %2202 = vst [vmem:[#allocation10 + $0x60] sm:$0xff] %v2090
    %2203 = vst [vmem:[#allocation10 + $0x68] sm:$0xff] %v2091
    %2204 = vst [vmem:[#allocation10 + $0x70] sm:$0xff] %v2092
    %2205 = vst [vmem:[#allocation10 + $0x78] sm:$0xff] %v2093
    %2206 = vst [vmem:[#allocation10 + $0x80] sm:$0xff] %v2094
    %2207 = vst [vmem:[#allocation10 + $0x88] sm:$0xff] %v2095
    %2208 = vst [vmem:[#allocation10 + $0x90] sm:$0xff] %v2096
    %2209 = vst [vmem:[#allocation10 + $0x98] sm:$0xff] %v2097
    %2210 = vst [vmem:[#allocation10 + $0xa0] sm:$0xff] %v2098
    %2211 = vst [vmem:[#allocation10 + $0xa8] sm:$0xff] %v2099
    %2212 = vst [vmem:[#allocation10 + $0xb0] sm:$0xff] %v2100
    %2213 = vst [vmem:[#allocation10 + $0xb8] sm:$0xff] %v2101
    %2214 = vst [vmem:[#allocation10 + $0xc0] sm:$0xff] %v2102
    %2215 = vst [vmem:[#allocation10 + $0xc8] sm:$0xff] %v2103
    %2216 = vst [vmem:[#allocation10 + $0xd0] sm:$0xff] %v2104
    %2217 = vst [vmem:[#allocation10 + $0xd8] sm:$0xff] %v2105
    %2218 = vst [vmem:[#allocation10 + $0xe0] sm:$0xff] %v2106
    %2219 = vst [vmem:[#allocation10 + $0xe8] sm:$0xff] %v2107
    %2220 = vst [vmem:[#allocation10 + $0xf0] sm:$0xff] %v2108
    %2221 = vst [vmem:[#allocation10 + $0xf8] sm:$0xff] %v2109
    %2222 = vst [vmem:[#allocation10 + $0x100] sm:$0xff] %v2110
    %2223 = vst [vmem:[#allocation10 + $0x108] sm:$0xff] %v2111
    %2224 = vst [vmem:[#allocation10 + $0x110] sm:$0xff] %v2112
    %2225 = vst [vmem:[#allocation10 + $0x118] sm:$0xff] %v2113
    %2226 = vst [vmem:[#allocation10 + $0x120] sm:$0xff] %v2114
    %2227 = vst [vmem:[#allocation10 + $0x128] sm:$0xff] %v2115
    %2228 = vst [vmem:[#allocation10 + $0x130] sm:$0xff] %v2116
    %2229 = vst [vmem:[#allocation10 + $0x138] sm:$0xff] %v2117
    %2230 = vst [vmem:[#allocation10 + $0x140] sm:$0xff] %v2118
    %2231 = vst [vmem:[#allocation10 + $0x148] sm:$0xff] %v2119
    %2232 = vst [vmem:[#allocation10 + $0x150] sm:$0xff] %v2120
    %2233 = vst [vmem:[#allocation10 + $0x158] sm:$0xff] %v2121
    %2234 = vst [vmem:[#allocation10 + $0x160] sm:$0xff] %v2122
    %2235 = vst [vmem:[#allocation10 + $0x168] sm:$0xff] %v2123
    %2236 = vst [vmem:[#allocation10 + $0x170] sm:$0xff] %v2124
    %2237 = vst [vmem:[#allocation10 + $0x178] sm:$0xff] %v2125
    %2238 = vst [vmem:[#allocation10 + $0x180] sm:$0xff] %v2126
    %2239 = vst [vmem:[#allocation10 + $0x188] sm:$0xff] %v2127
    %2240 = vst [vmem:[#allocation10 + $0x190] sm:$0xff] %v2128
    %2241 = vst [vmem:[#allocation10 + $0x198] sm:$0xff] %v2129
    %2242 = vst [vmem:[#allocation10 + $0x1a0] sm:$0xff] %v2130
    %2243 = vst [vmem:[#allocation10 + $0x1a8] sm:$0xff] %v2131
    %2244 = vst [vmem:[#allocation10 + $0x1b0] sm:$0xff] %v2132
    %2245 = vst [vmem:[#allocation10 + $0x1b8] sm:$0xff] %v2133
    %2246 = vst [vmem:[#allocation10 + $0x1c0] sm:$0xff] %v2134
    %2247 = vst [vmem:[#allocation10 + $0x1c8] sm:$0xff] %v2135
    %2248 = vst [vmem:[#allocation10 + $0x1d0] sm:$0xff] %v2136
    %2249 = vst [vmem:[#allocation10 + $0x1d8] sm:$0xff] %v2137
    %2250 = vst [vmem:[#allocation10 + $0x1e0] sm:$0xff] %v2138
    %2251 = vst [vmem:[#allocation10 + $0x1e8] sm:$0xff] %v2139
    %2252 = vst [vmem:[#allocation10 + $0x1f0] sm:$0xff] %v2140
    %2253 = vst [vmem:[#allocation10 + $0x1f8] sm:$0xff] %v2141
    %2254 = vst [vmem:[#allocation10 + $0x200] sm:$0xff] %v2142
    %2255 = vst [vmem:[#allocation10 + $0x208] sm:$0xff] %v2143
    %2256 = vst [vmem:[#allocation10 + $0x210] sm:$0xff] %v2144
    %2257 = vst [vmem:[#allocation10 + $0x218] sm:$0xff] %v2145
    %2258 = vst [vmem:[#allocation10 + $0x220] sm:$0xff] %v2146
    %2259 = vst [vmem:[#allocation10 + $0x228] sm:$0xff] %v2147
    %2260 = vst [vmem:[#allocation10 + $0x230] sm:$0xff] %v2148
    %2261 = vst [vmem:[#allocation10 + $0x238] sm:$0xff] %v2149
    %2262 = vst [vmem:[#allocation10 + $0x240] sm:$0xff] %v2150
    %2263 = vst [vmem:[#allocation10 + $0x248] sm:$0xff] %v2151
    %2264 = vst [vmem:[#allocation10 + $0x250] sm:$0xff] %v2152
    %2265 = vst [vmem:[#allocation10 + $0x258] sm:$0xff] %v2153
    %2266 = vst [vmem:[#allocation10 + $0x260] sm:$0xff] %v2154
    %2267 = vst [vmem:[#allocation10 + $0x268] sm:$0xff] %v2155
    %2268 = vst [vmem:[#allocation10 + $0x270] sm:$0xff] %v2156
    %2269 = vst [vmem:[#allocation10 + $0x278] sm:$0xff] %v2157
    %2270 = vst [vmem:[#allocation10 + $0x280] sm:$0xff] %v2158
    %2271 = vst [vmem:[#allocation10 + $0x288] sm:$0xff] %v2159
    %2272 = vst [vmem:[#allocation10 + $0x290] sm:$0xff] %v2160
    %2273 = vst [vmem:[#allocation10 + $0x298] sm:$0xff] %v2161
    %2274 = vst [vmem:[#allocation10 + $0x2a0] sm:$0xff] %v2162
    %2275 = vst [vmem:[#allocation10 + $0x2a8] sm:$0xff] %v2163
    %2276 = vst [vmem:[#allocation10 + $0x2b0] sm:$0xff] %v2164
    %2277 = vst [vmem:[#allocation10 + $0x2b8] sm:$0xff] %v2165
    %2278 = vst [vmem:[#allocation10 + $0x2c0] sm:$0xff] %v2166
    %2279 = vst [vmem:[#allocation10 + $0x2c8] sm:$0xff] %v2167
    %2280 = vst [vmem:[#allocation10 + $0x2d0] sm:$0xff] %v2168
    %2281 = vst [vmem:[#allocation10 + $0x2d8] sm:$0xff] %v2169
    %2282 = vst [vmem:[#allocation10 + $0x2e0] sm:$0xff] %v2170
    %2283 = vst [vmem:[#allocation10 + $0x2e8] sm:$0xff] %v2171
    %2284 = vst [vmem:[#allocation10 + $0x2f0] sm:$0xff] %v2172
    %2285 = vst [vmem:[#allocation10 + $0x2f8] sm:$0xff] %v2173
    %2286 = vst [vmem:[#allocation10 + $0x300] sm:$0xff] %v2174
    %2287 = vst [vmem:[#allocation10 + $0x308] sm:$0xff] %v2175
    %2288 = vst [vmem:[#allocation10 + $0x310] sm:$0xff] %v2176
    %2289 = vst [vmem:[#allocation10 + $0x318] sm:$0xff] %v2177
    %2290 = vst [vmem:[#allocation10 + $0x320] sm:$0xff] %v2178
    %2291 = vst [vmem:[#allocation10 + $0x328] sm:$0xff] %v2179
    %2292 = vst [vmem:[#allocation10 + $0x330] sm:$0xff] %v2180
    %2293 = vst [vmem:[#allocation10 + $0x338] sm:$0xff] %v2181
    %2294 = vst [vmem:[#allocation10 + $0x340] sm:$0xff] %v2182
    %2295 = vst [vmem:[#allocation10 + $0x348] sm:$0xff] %v2183
    %2296 = vst [vmem:[#allocation10 + $0x350] sm:$0xff] %v2184
    %2297 = vst [vmem:[#allocation10 + $0x358] sm:$0xff] %v2185
    %2298 = vst [vmem:[#allocation10 + $0x360] sm:$0xff] %v2186
    %2299 = vst [vmem:[#allocation10 + $0x368] sm:$0xff] %v2187
    %2300 = vst [vmem:[#allocation10 + $0x370] sm:$0xff] %v2188
    %2301 = vst [vmem:[#allocation10 + $0x378] sm:$0xff] %v2189
    // Predicated region
    $region46: #{tpu_custom_call.1} parent=1 // pred_check
      _
    $region47: #{tpu_custom_call.1} parent=1 // pred_check_branch
      %2303 = sbr.rel (0) target = $region49
    $region48: #{tpu_custom_call.1} parent=1 // pred_region
      %s2305 = ssub.s32 14336, 14336
      %2306 = vsyncadd [#allocation4], %s2305
      %s2307 = sshll.u32 [#allocation10], 4
      %s2308 = int_to_ptr.vmem [resolvable:$true] %s2307
      %2313 = dma.vmem_to_hbm [thread:$0]  %s2308, 14336, %s7, [#allocation4], 896, 896, 56
    $region49: #{tpu_custom_call.1} parent=1 // pred_fallthru
      _
    // Predicated region
    $region50: #{tpu_custom_call.1} parent=1 // pred_check
      _
    $region51: #{tpu_custom_call.1} parent=1 // pred_check_branch
      %2315 = sbr.rel (0) target = $region53
    $region52: #{tpu_custom_call.1} parent=1 // pred_region
      %2316 = dma.done [#allocation4], 14336
    $region53: #{tpu_custom_call.1} parent=1 // pred_fallthru
      _
    %2317 = vsyncpa [#allocation3], 1
    %2318 = vsyncpa [#allocation6], 1
    %2319 = vsyncpa [#allocation9], 1
    %2320 = vsyncpa [#allocation4], 1

</llo_original>
